<compile_context>
chip_gen: v7x
topology: tpu7x:2x2x1
jax: 0.10.0
libtpu: 0.0.40
codegen_flags: <defaults>
</compile_context>

<pallas_src>
import functools

import jax
import jax.numpy as jnp
from jax.experimental import pallas as pl
from jax.experimental.pallas import tpu as pltpu


def linear_kernel(x_ref, w_ref, b_ref, o_ref):
    # x_ref: (M, K)  f32, resident across all N-tiles (constant block index)
    # w_ref: (K, TN) bf16 weight tile streamed from HBM
    # b_ref: (1, TN) f32 bias tile
    # o_ref: (M, TN) f32 output tile (last tile partially masked: N=1000<1024)
    x_bf = x_ref[...].astype(jnp.bfloat16)  # tiny cast; keeps MXU in native bf16
    acc = jnp.dot(x_bf, w_ref[...], preferred_element_type=jnp.float32)
    o_ref[...] = (acc + b_ref[...]).astype(o_ref.dtype)


def prepare_linear_params(w, b, *, tn=512, weight_dtype=jnp.bfloat16):
    """One-time host prep: W (N, K) -> (K, Np) cast + zero-padded, bias -> (1, Np)."""
    n_out, _ = w.shape
    n_pad = (-n_out) % tn
    w_p = jnp.pad(w.T.astype(weight_dtype), ((0, 0), (0, n_pad)))
    b_p = jnp.pad(b.astype(jnp.float32), ((0, n_pad),)).reshape(1, n_out + n_pad)
    return w_p, b_p


@functools.partial(jax.jit, static_argnames=("n_out", "tn"))
def linear_pallas(x, w_p, b_p, *, n_out, tn=512):
    """y = x @ w_p[:, :n_out] + b_p[:, :n_out]; w_p/b_p already padded to tn."""
    M, K = x.shape
    Kw, Np = w_p.shape
    assert K == Kw and Np % tn == 0 and tn % 128 == 0

    cost = pl.CostEstimate(
        flops=2 * M * K * Np,
        transcendentals=0,
        bytes_accessed=(M * K * x.dtype.itemsize          # activations
                        + K * Np * w_p.dtype.itemsize     # streamed weight (bf16)
                        + Np * 4                          # bias
                        + M * n_out * 4),                 # output
    )

    return pl.pallas_call(
        linear_kernel,
        out_shape=jax.ShapeDtypeStruct((M, n_out), jnp.float32),
        grid_spec=pltpu.PrefetchScalarGridSpec(
            num_scalar_prefetch=0,
            grid=(Np // tn,),
            in_specs=[
                pl.BlockSpec((M, K), lambda j: (0, 0)),    # x: full, reused per tile
                pl.BlockSpec((K, tn), lambda j: (0, j)),   # weight N-tile
                pl.BlockSpec((1, tn), lambda j: (0, j)),   # bias N-tile
            ],
            out_specs=pl.BlockSpec((M, tn), lambda j: (0, j)),
        ),
        compiler_params=pltpu.CompilerParams(
            dimension_semantics=("parallel",),
        ),
        cost_estimate=cost,
    )(x, w_p, b_p)


if __name__ == "__main__":
    IN_FEATURES = 1024
    OUT_FEATURES = 1000
    BATCH = 1  # matches the PyTorch module's x156 of shape (1, 1024)
    TN = 512

    key = jax.random.PRNGKey(0)
    kx, kw, kb = jax.random.split(key, 3)

    # PyTorch Linear layout: weight (out, in), bias (out,)
    x = jax.random.normal(kx, (BATCH, IN_FEATURES), dtype=jnp.float32)
    w = jax.random.normal(kw, (OUT_FEATURES, IN_FEATURES), dtype=jnp.float32) * 0.02
    b = jax.random.normal(kb, (OUT_FEATURES,), dtype=jnp.float32) * 0.02

    # Hoisted one-time parameter preparation (transpose + bf16 cast + pad).
    w_p, b_p = jax.block_until_ready(prepare_linear_params(w, b, tn=TN))

    y = linear_pallas(x, w_p, b_p, n_out=OUT_FEATURES, tn=TN)
    y = jax.block_until_ready(y)
    assert y.shape == (BATCH, OUT_FEATURES)

    # Tight check: reference built from the exact same bf16-rounded operands.
    x_bf = x.astype(jnp.bfloat16).astype(jnp.float32)
    w_bf = w_p[:, :OUT_FEATURES].astype(jnp.float32)
    y_ref = jnp.dot(x_bf, w_bf, precision=jax.lax.Precision.HIGHEST) + b
    assert jnp.allclose(y, y_ref, atol=1e-4, rtol=1e-4)

    # Loose sanity check against the full-f32 PyTorch-equivalent Linear
    # (difference is only the deliberate bf16 weight/activation rounding).
    y_f32 = x @ w.T + b
    assert float(jnp.max(jnp.abs(y - y_f32))) < 5e-2

    print("KERNEL_OK")
</pallas_src>

<mosaic_0001>
module attributes {stable_mosaic.version = 11 : i64} {
  func.func @linear_kernel(%arg0: i32, %arg1: memref<1x1024xf32, #tpu.memory_space<vmem>>, %arg2: memref<1024x512xbf16, #tpu.memory_space<vmem>>, %arg3: memref<1x512xf32, #tpu.memory_space<vmem>>, %arg4: memref<1x512xf32, #tpu.memory_space<vmem>>) attributes {dimension_semantics = [#tpu.dimension_semantics<parallel>], iteration_bounds = array<i64: 2>, scalar_prefetch = 0 : i64, scratch_operands = 0 : i64, tpu.core_type = #tpu.core_type<tc>, window_params = [{pipeline_mode = #tpu.pipeline_mode<synchronous>, transform_indices = @transform_0, window_bounds = array<i64: 1, 1024>}, {transform_indices = @transform_1, window_bounds = array<i64: 1024, 512>}, {transform_indices = @transform_2, window_bounds = array<i64: 1, 512>}, {transform_indices = @transform_3, window_bounds = array<i64: 1, 512>}]} {
    %c0 = arith.constant 0 : index
    %c0_0 = arith.constant 0 : index
    %0 = vector.load %arg1[%c0, %c0_0] : memref<1x1024xf32, #tpu.memory_space<vmem>>, vector<1x1024xf32>
    %1 = arith.truncf %0 : vector<1x1024xf32> to vector<1x1024xbf16>
    %c0_1 = arith.constant 0 : index
    %c0_2 = arith.constant 0 : index
    %2 = vector.load %arg2[%c0_1, %c0_2] : memref<1024x512xbf16, #tpu.memory_space<vmem>>, vector<1024x512xbf16>
    %cst = arith.constant dense<0.000000e+00> : vector<1x512xf32>
    %3 = tpu.matmul %1, %2, %cst {dimension_numbers = #tpu.dot_dimension_numbers<[1], [0], [0], [1], [0, 0, 1, 1], [], []>} : vector<1x1024xbf16>, vector<1024x512xbf16>, vector<1x512xf32> -> vector<1x512xf32>
    %c0_3 = arith.constant 0 : index
    %c0_4 = arith.constant 0 : index
    %4 = vector.load %arg3[%c0_3, %c0_4] : memref<1x512xf32, #tpu.memory_space<vmem>>, vector<1x512xf32>
    %5 = arith.addf %3, %4 : vector<1x512xf32>
    %c0_5 = arith.constant 0 : index
    %c0_6 = arith.constant 0 : index
    %6 = vector.load %arg4[%c0_5, %c0_6] : memref<1x512xf32, #tpu.memory_space<vmem>>, vector<1x512xf32>
    tpu.vector_store %arg4[%c0_5, %c0_6], %5 {strides = array<i32>} : memref<1x512xf32, #tpu.memory_space<vmem>>, vector<1x512xf32>,
    return
  }
  func.func @transform_0(%arg0: i32) -> (i32, i32) {
    %c0_i32 = arith.constant 0 : i32
    %c0_i32_0 = arith.constant 0 : i32
    %c0_i32_1 = arith.constant 0 : i32
    return %c0_i32, %c0_i32_0 : i32, i32
  }
  func.func @transform_1(%arg0: i32) -> (i32, i32) {
    %c0_i32 = arith.constant 0 : i32
    %c0_i32_0 = arith.constant 0 : i32
    return %c0_i32, %arg0 : i32, i32
  }
  func.func @transform_2(%arg0: i32) -> (i32, i32) {
    %c0_i32 = arith.constant 0 : i32
    %c0_i32_0 = arith.constant 0 : i32
    return %c0_i32, %arg0 : i32, i32
  }
  func.func @transform_3(%arg0: i32) -> (i32, i32) {
    %c0_i32 = arith.constant 0 : i32
    %c0_i32_0 = arith.constant 0 : i32
    return %c0_i32, %arg0 : i32, i32
  }
}

</mosaic_0001>

<llo_original>
// kernel: linear_pallas.1
$region0: #{linear_pallas.1}
  #allocation0 [shape = 'u32[]', space=smem, size = 0x4, offset = 0x4, fixed_abs, tag = 'smem constant byte address 0x4 - core index']
  #allocation1 [shape = 'u32[144,128]{1,0:T(1,128)}', space=vmem, size = 0x12000, scoped, tag = 'internal scratch']
  %s0 = inlined_call_operand.hbm [shape: f32[1,1024], index: 0, kind: input, shape index: {}]
  %s1 = inlined_call_operand.hbm [shape: bf16[1024,1024], index: 1, kind: input, shape index: {}]
  %s2 = inlined_call_operand.hbm [shape: f32[1,1024], index: 2, kind: input, shape index: {}]
  %s3 = inlined_call_operand.hbm [shape: f32[1,1000], index: 3, kind: output, shape index: {}]
  %s4 = sld [smem:[#allocation0]]
  $region57: #{linear_pallas.1} parent=0
    _
  %s6 = ssub.s32 1, %s4
  %s7 = scalar_select 0, %s6, %s4
  $region1: #{linear_pallas.1} parent=0
    #allocation2 [shape = 'u8[4096]{0}', space=vmem, size = 0x1000, scoped, tag = 'input window, operand 0, single buffered']
    #allocation3 [shape = 's32[2]{0}', space=sflag, size = 0x8, scoped, tag = 'scoped memory for linear_pallas.1']
    #allocation4 [shape = 's32[2]{0}', space=sflag, size = 0x8, scoped, tag = 'scoped memory for linear_pallas.1']
    #allocation5 [shape = 'u8[2097152]{0}', space=vmem, size = 0x200000, scoped, tag = 'input window, operand 1']
    #allocation6 [shape = 's32[2]{0}', space=sflag, size = 0x8, scoped, tag = 'scoped memory for linear_pallas.1']
    #allocation7 [shape = 'u8[4096]{0}', space=vmem, size = 0x1000, scoped, tag = 'input window, operand 2']
    #allocation8 [shape = 'u8[4096]{0}', space=vmem, size = 0x1000, scoped, tag = 'output window, operand 0']
    %8 = vsyncpa [#allocation3], 0
    %9 = vsyncpa [#allocation6], 0
    %s10 = scalar_lea.sflag [#allocation6], 1
    %11 = vsyncpa %s10, 0
    %12 = vsyncpa [#allocation4], 0
    %s13 = scalar_lea.sflag [#allocation4], 1
    %14 = vsyncpa %s13, 0
    loop: start=0, step=1, limit=4
    $region2: #{linear_pallas.1} parent=1 // loop_pre_header
      _
    $region3: #{linear_pallas.1} parent=1 // loop_header
      %s16 = sphi 0, %s20
      %p17 = scmp.ge.s32.totalorder %s16, 4
      %s24 = sphi 0, %s24
      %s26 = sphi 0, %s24
      %s27 = sphi 0, %s26
      %s41 = sphi 0, %s27
      %s47 = sphi 0, %s49
      %s50 = sphi 0, %s47
      %s51 = sphi 0, %s50
      %s67 = sphi 0, %s51
      %s73 = sphi 0, %s75
      %s76 = sphi 0, %s73
      %s77 = sphi 0, %s76
      %s93 = sphi 0, %s77
      %s99 = sphi 0, %s101
      %s102 = sphi 0, %s99
      %s103 = sphi 0, %s102
      %s119 = sphi 0, %s103
    $region4: #{linear_pallas.1} parent=1 // loop_header_branch
      %19 = sbr.rel (%p17) target = $region8
    $region5: #{linear_pallas.1} parent=1 // loop_body
      %s21 = ssub.s32 %s16, 1
      %s22 = ssub.s32 %s16, 2
      %s23 = sadd.s32 %s16, 1
      %s25 = sadd.s32 %s24, 1
      %p28 = scmp.eq.s32.totalorder %s16, 1
      %p29 = scmp.ne.s32.totalorder %s24, %s26
      %p30 = scmp.eq.s32.totalorder %s16, 0
      %p31 = por %p29, %p30
      %p32 = scmp.ne.s32.totalorder %s24, %s26
      %p33 = scmp.eq.s32.totalorder %s21, 1
      %p34 = por %p32, %p33
      %p35 = scmp.ne.s32.totalorder %s26, %s27
      %p36 = scmp.eq.s32.totalorder %s21, 0
      %p37 = por %p35, %p36
      %p38 = scmp.ne.s32.totalorder %s26, %s27
      %p39 = scmp.eq.s32.totalorder %s22, 1
      %p40 = por %p38, %p39
      %p42 = scmp.ne.s32.totalorder %s27, %s41
      %p43 = scmp.eq.s32.totalorder %s22, 0
      %p44 = por %p42, %p43
      %s45 = ssub.s32 %s16, %s23
      %p46 = scmp.eq.s32.totalorder %s45, 0
      %s48 = sadd.s32 %s47, 1
      %s49 = scalar_select %p46, %s47, %s48
      %p52 = pneg %p46
      %p53 = scmp.eq.s32.totalorder %s16, 1
      %p54 = por %p52, %p53
      %p55 = scmp.ne.s32.totalorder %s47, %s50
      %p56 = scmp.eq.s32.totalorder %s16, 0
      %p57 = por %p55, %p56
      %p58 = scmp.ne.s32.totalorder %s47, %s50
      %p59 = scmp.eq.s32.totalorder %s21, 1
      %p60 = por %p58, %p59
      %p61 = scmp.ne.s32.totalorder %s50, %s51
      %p62 = scmp.eq.s32.totalorder %s21, 0
      %p63 = por %p61, %p62
      %p64 = scmp.ne.s32.totalorder %s50, %s51
      %p65 = scmp.eq.s32.totalorder %s22, 1
      %p66 = por %p64, %p65
      %p68 = scmp.ne.s32.totalorder %s51, %s67
      %p69 = scmp.eq.s32.totalorder %s22, 0
      %p70 = por %p68, %p69
      %s71 = ssub.s32 %s16, %s23
      %p72 = scmp.eq.s32.totalorder %s71, 0
      %s74 = sadd.s32 %s73, 1
      %s75 = scalar_select %p72, %s73, %s74
      %p78 = pneg %p72
      %p79 = scmp.eq.s32.totalorder %s16, 1
      %p80 = por %p78, %p79
      %p81 = scmp.ne.s32.totalorder %s73, %s76
      %p82 = scmp.eq.s32.totalorder %s16, 0
      %p83 = por %p81, %p82
      %p84 = scmp.ne.s32.totalorder %s73, %s76
      %p85 = scmp.eq.s32.totalorder %s21, 1
      %p86 = por %p84, %p85
      %p87 = scmp.ne.s32.totalorder %s76, %s77
      %p88 = scmp.eq.s32.totalorder %s21, 0
      %p89 = por %p87, %p88
      %p90 = scmp.ne.s32.totalorder %s76, %s77
      %p91 = scmp.eq.s32.totalorder %s22, 1
      %p92 = por %p90, %p91
      %p94 = scmp.ne.s32.totalorder %s77, %s93
      %p95 = scmp.eq.s32.totalorder %s22, 0
      %p96 = por %p94, %p95
      %s97 = ssub.s32 %s16, %s23
      %p98 = scmp.eq.s32.totalorder %s97, 0
      %s100 = sadd.s32 %s99, 1
      %s101 = scalar_select %p98, %s99, %s100
      %p104 = pneg %p98
      %p105 = scmp.eq.s32.totalorder %s16, 1
      %p106 = por %p104, %p105
      %p107 = scmp.ne.s32.totalorder %s99, %s102
      %p108 = scmp.eq.s32.totalorder %s16, 0
      %p109 = por %p107, %p108
      %p110 = scmp.ne.s32.totalorder %s99, %s102
      %p111 = scmp.eq.s32.totalorder %s21, 1
      %p112 = por %p110, %p111
      %p113 = scmp.ne.s32.totalorder %s102, %s103
      %p114 = scmp.eq.s32.totalorder %s21, 0
      %p115 = por %p113, %p114
      %p116 = scmp.ne.s32.totalorder %s102, %s103
      %p117 = scmp.eq.s32.totalorder %s22, 1
      %p118 = por %p116, %p117
      %p120 = scmp.ne.s32.totalorder %s103, %s119
      %p121 = scmp.eq.s32.totalorder %s22, 0
      %p122 = por %p120, %p121
      %p123 = scmp.le.s32.totalorder 1, %s16
      %p124 = scmp.lt.s32.totalorder %s16, 3
      %p125 = pnand %p123, %p124
      %p126 = pneg %p125
      // Predicated region
      $region9: #{linear_pallas.1} parent=5 // pred_check
        _
      $region10: #{linear_pallas.1} parent=5 // pred_check_branch
        %128 = sbr.rel (%p125) target = $region12
      $region11: #{linear_pallas.1} parent=5 // pred_region
        %s129 = ssub.s32 %s16, 1
        // Predicated region
        $region13: #{linear_pallas.1} parent=11 // pred_check
          %p130 = pneg %p37
        $region14: #{linear_pallas.1} parent=11 // pred_check_branch
          %132 = sbr.rel (%p130) target = $region16
        $region15: #{linear_pallas.1} parent=11 // pred_region
          %s134 = ssub.s32 128, 128
          %135 = vsyncadd [#allocation3], %s134
          %s137 = sshll.u32 [#allocation2], 4
          %s138 = int_to_ptr.vmem [resolvable:$true] %s137
          %140 = dma.hbm_to_vmem [thread:$0]  %s0, 128, %s138, [#allocation3]
        $region16: #{linear_pallas.1} parent=11 // pred_fallthru
          _
      $region12: #{linear_pallas.1} parent=5 // pred_fallthru
        _
      %p141 = scmp.lt.s32.totalorder %s16, 2
      // Predicated region
      $region17: #{linear_pallas.1} parent=5 // pred_check
        %p142 = pneg %p141
      $region18: #{linear_pallas.1} parent=5 // pred_check_branch
        %144 = sbr.rel (%p142) target = $region20
      $region19: #{linear_pallas.1} parent=5 // pred_region
        // Predicated region
        $region21: #{linear_pallas.1} parent=19 // pred_check
          %p145 = pneg %p57
        $region22: #{linear_pallas.1} parent=19 // pred_check_branch
          %147 = sbr.rel (%p145) target = $region24
        $region23: #{linear_pallas.1} parent=19 // pred_region
          %s148 = sand.u32 %s16, 1
          %s149 = scalar_lea.sflag [#allocation6], %s148
          %s150 = sand.u32 %s47, 1
          %s151 = smul.addr %s150, 2048
          %s152 = scalar_lea.vmem [#allocation5], %s151
          %s153 = smul.u32 4, %s16
          %s155 = ssub.s32 32768, 32768
          %156 = vsyncadd %s149, %s155
          %s157 = smul.addr %s153, 64
          %s158 = scalar_lea.hbm %s1, %s157
          %s159 = sshll.u32 %s152, 4
          %s160 = int_to_ptr.vmem [resolvable:$true] %s159
          %165 = dma.hbm_to_vmem [thread:$0]  %s158, 32768, %s160, %s149, 512, 256, 16
        $region24: #{linear_pallas.1} parent=19 // pred_fallthru
          _
        // Predicated region
        $region25: #{linear_pallas.1} parent=19 // pred_check
          %p166 = pneg %p83
        $region26: #{linear_pallas.1} parent=19 // pred_check_branch
          %168 = sbr.rel (%p166) target = $region28
        $region27: #{linear_pallas.1} parent=19 // pred_region
          %s169 = sand.u32 %s16, 1
          %s170 = scalar_lea.sflag [#allocation6], %s169
          %s171 = sand.u32 %s73, 1
          %s172 = smul.addr %s171, 4
          %s173 = scalar_lea.vmem [#allocation7], %s172
          %s174 = smul.u32 4, %s16
          %s176 = ssub.s32 64, 64
          %177 = vsyncadd %s170, %s176
          %s178 = smul.addr %s174, 16
          %s179 = scalar_lea.hbm %s2, %s178
          %s181 = sshll.u32 %s173, 4
          %s182 = int_to_ptr.vmem [resolvable:$true] %s181
          %184 = dma.hbm_to_vmem [thread:$0]  %s179, 64, %s182, %s170
        $region28: #{linear_pallas.1} parent=19 // pred_fallthru
          _
      $region20: #{linear_pallas.1} parent=5 // pred_fallthru
        _
      %p185 = scmp.le.s32.totalorder 1, %s16
      %p186 = scmp.lt.s32.totalorder %s16, 3
      %p187 = pnand %p185, %p186
      %p188 = pneg %p187
      // Predicated region
      $region29: #{linear_pallas.1} parent=5 // pred_check
        _
      $region30: #{linear_pallas.1} parent=5 // pred_check_branch
        %190 = sbr.rel (%p187) target = $region32
      $region31: #{linear_pallas.1} parent=5 // pred_region
        %s191 = ssub.s32 %s16, 1
        // Predicated region
        $region33: #{linear_pallas.1} parent=31 // pred_check
          %p192 = pneg %p37
        $region34: #{linear_pallas.1} parent=31 // pred_check_branch
          %194 = sbr.rel (%p192) target = $region36
        $region35: #{linear_pallas.1} parent=31 // pred_region
          %195 = dma.done [#allocation3], 128
        $region36: #{linear_pallas.1} parent=31 // pred_fallthru
          _
        %s196 = sand.u32 %s21, 1
        %s197 = scalar_lea.sflag [#allocation6], %s196
        %s198 = sand.u32 %s50, 1
        %s199 = smul.addr %s198, 2048
        %s200 = scalar_lea.vmem [#allocation5], %s199
        // Predicated region
        $region37: #{linear_pallas.1} parent=31 // pred_check
          %p201 = pneg %p63
        $region38: #{linear_pallas.1} parent=31 // pred_check_branch
          %203 = sbr.rel (%p201) target = $region40
        $region39: #{linear_pallas.1} parent=31 // pred_region
          %204 = dma.done %s197, 32768
        $region40: #{linear_pallas.1} parent=31 // pred_fallthru
          _
        %s205 = sand.u32 %s21, 1
        %s206 = scalar_lea.sflag [#allocation6], %s205
        %s207 = sand.u32 %s76, 1
        %s208 = smul.addr %s207, 4
        %s209 = scalar_lea.vmem [#allocation7], %s208
        // Predicated region
        $region41: #{linear_pallas.1} parent=31 // pred_check
          %p210 = pneg %p89
        $region42: #{linear_pallas.1} parent=31 // pred_check_branch
          %212 = sbr.rel (%p210) target = $region44
        $region43: #{linear_pallas.1} parent=31 // pred_region
          %213 = dma.done %s206, 64
        $region44: #{linear_pallas.1} parent=31 // pred_fallthru
          _
        %p214 = pneg %p37
        %p215 = pneg %p34
        %s216 = sand.u32 %s21, 1
        %s217 = scalar_lea.sflag [#allocation6], %s216
        %s218 = sand.u32 %s50, 1
        %s219 = smul.addr %s218, 2048
        %s220 = scalar_lea.vmem [#allocation5], %s219
        %p221 = pneg %p63
        %p222 = pneg %p60
        %s223 = sand.u32 %s21, 1
        %s224 = scalar_lea.sflag [#allocation6], %s223
        %s225 = sand.u32 %s76, 1
        %s226 = smul.addr %s225, 4
        %s227 = scalar_lea.vmem [#allocation7], %s226
        %p228 = pneg %p89
        %p229 = pneg %p86
        %p230 = pneg %p115
        %p231 = pneg %p112
        %s232 = sand.u32 %s102, 1
        %s233 = scalar_lea.sflag [#allocation4], %s232
        %s234 = sand.u32 %s102, 1
        %s235 = smul.addr %s234, 4
        %s236 = scalar_lea.vmem [#allocation8], %s235
        %s237 = smul.u32 4, %s21
        %s238 = smul.u32 4, %s21
        %s239 = smul.u32 4, %s21
        %v240 = vld [vmem:[#allocation2] sm:$0xff]
        %v242 = vlaneseq
        %v243 = vshrl.u32 %v242, 7
        %v244 = vsub.s32 0, %v243
        %v245 = vrot.slane %v240, %v244
        %v246 = vlaneseq
        %v247 = vshrl.u32 %v246, 7
        %v248 = vsub.s32 1, %v247
        %v249 = vrot.slane %v240, %v248
        %v250 = vlaneseq
        %v251 = vshrl.u32 %v250, 7
        %v252 = vsub.s32 2, %v251
        %v253 = vrot.slane %v240, %v252
        %v254 = vlaneseq
        %v255 = vshrl.u32 %v254, 7
        %v256 = vsub.s32 3, %v255
        %v257 = vrot.slane %v240, %v256
        %v258 = vlaneseq
        %v259 = vshrl.u32 %v258, 7
        %v260 = vsub.s32 4, %v259
        %v261 = vrot.slane %v240, %v260
        %v262 = vlaneseq
        %v263 = vshrl.u32 %v262, 7
        %v264 = vsub.s32 5, %v263
        %v265 = vrot.slane %v240, %v264
        %v266 = vlaneseq
        %v267 = vshrl.u32 %v266, 7
        %v268 = vsub.s32 6, %v267
        %v269 = vrot.slane %v240, %v268
        %v270 = vlaneseq
        %v271 = vshrl.u32 %v270, 7
        %v272 = vsub.s32 7, %v271
        %v273 = vrot.slane %v240, %v272
        %v282 = vpack.c.bf16 %v245, %v245
        %v283 = vpack.c.bf16 %v249, %v249
        %v284 = vpack.c.bf16 %v253, %v253
        %v285 = vpack.c.bf16 %v257, %v257
        %v286 = vpack.c.bf16 %v261, %v261
        %v287 = vpack.c.bf16 %v265, %v265
        %v288 = vpack.c.bf16 %v269, %v269
        %v289 = vpack.c.bf16 %v273, %v273
        %v290 = vld [vmem:[%s200] sm:$0xff]
        %v291 = vld [vmem:[%s200 + $0x8] sm:$0xff]
        %v292 = vld [vmem:[%s200 + $0x10] sm:$0xff]
        %v293 = vld [vmem:[%s200 + $0x18] sm:$0xff]
        %v294 = vld [vmem:[%s200 + $0x20] sm:$0xff]
        %v295 = vld [vmem:[%s200 + $0x28] sm:$0xff]
        %v296 = vld [vmem:[%s200 + $0x30] sm:$0xff]
        %v297 = vld [vmem:[%s200 + $0x38] sm:$0xff]
        %v298 = vld [vmem:[%s200 + $0x40] sm:$0xff]
        %v299 = vld [vmem:[%s200 + $0x48] sm:$0xff]
        %v300 = vld [vmem:[%s200 + $0x50] sm:$0xff]
        %v301 = vld [vmem:[%s200 + $0x58] sm:$0xff]
        %v302 = vld [vmem:[%s200 + $0x60] sm:$0xff]
        %v303 = vld [vmem:[%s200 + $0x68] sm:$0xff]
        %v304 = vld [vmem:[%s200 + $0x70] sm:$0xff]
        %v305 = vld [vmem:[%s200 + $0x78] sm:$0xff]
        %v306 = vld [vmem:[%s200 + $0x80] sm:$0xff]
        %v307 = vld [vmem:[%s200 + $0x88] sm:$0xff]
        %v308 = vld [vmem:[%s200 + $0x90] sm:$0xff]
        %v309 = vld [vmem:[%s200 + $0x98] sm:$0xff]
        %v310 = vld [vmem:[%s200 + $0xa0] sm:$0xff]
        %v311 = vld [vmem:[%s200 + $0xa8] sm:$0xff]
        %v312 = vld [vmem:[%s200 + $0xb0] sm:$0xff]
        %v313 = vld [vmem:[%s200 + $0xb8] sm:$0xff]
        %v314 = vld [vmem:[%s200 + $0xc0] sm:$0xff]
        %v315 = vld [vmem:[%s200 + $0xc8] sm:$0xff]
        %v316 = vld [vmem:[%s200 + $0xd0] sm:$0xff]
        %v317 = vld [vmem:[%s200 + $0xd8] sm:$0xff]
        %v318 = vld [vmem:[%s200 + $0xe0] sm:$0xff]
        %v319 = vld [vmem:[%s200 + $0xe8] sm:$0xff]
        %v320 = vld [vmem:[%s200 + $0xf0] sm:$0xff]
        %v321 = vld [vmem:[%s200 + $0xf8] sm:$0xff]
        %v322 = vld [vmem:[%s200 + $0x100] sm:$0xff]
        %v323 = vld [vmem:[%s200 + $0x108] sm:$0xff]
        %v324 = vld [vmem:[%s200 + $0x110] sm:$0xff]
        %v325 = vld [vmem:[%s200 + $0x118] sm:$0xff]
        %v326 = vld [vmem:[%s200 + $0x120] sm:$0xff]
        %v327 = vld [vmem:[%s200 + $0x128] sm:$0xff]
        %v328 = vld [vmem:[%s200 + $0x130] sm:$0xff]
        %v329 = vld [vmem:[%s200 + $0x138] sm:$0xff]
        %v330 = vld [vmem:[%s200 + $0x140] sm:$0xff]
        %v331 = vld [vmem:[%s200 + $0x148] sm:$0xff]
        %v332 = vld [vmem:[%s200 + $0x150] sm:$0xff]
        %v333 = vld [vmem:[%s200 + $0x158] sm:$0xff]
        %v334 = vld [vmem:[%s200 + $0x160] sm:$0xff]
        %v335 = vld [vmem:[%s200 + $0x168] sm:$0xff]
        %v336 = vld [vmem:[%s200 + $0x170] sm:$0xff]
        %v337 = vld [vmem:[%s200 + $0x178] sm:$0xff]
        %v338 = vld [vmem:[%s200 + $0x180] sm:$0xff]
        %v339 = vld [vmem:[%s200 + $0x188] sm:$0xff]
        %v340 = vld [vmem:[%s200 + $0x190] sm:$0xff]
        %v341 = vld [vmem:[%s200 + $0x198] sm:$0xff]
        %v342 = vld [vmem:[%s200 + $0x1a0] sm:$0xff]
        %v343 = vld [vmem:[%s200 + $0x1a8] sm:$0xff]
        %v344 = vld [vmem:[%s200 + $0x1b0] sm:$0xff]
        %v345 = vld [vmem:[%s200 + $0x1b8] sm:$0xff]
        %v346 = vld [vmem:[%s200 + $0x1c0] sm:$0xff]
        %v347 = vld [vmem:[%s200 + $0x1c8] sm:$0xff]
        %v348 = vld [vmem:[%s200 + $0x1d0] sm:$0xff]
        %v349 = vld [vmem:[%s200 + $0x1d8] sm:$0xff]
        %v350 = vld [vmem:[%s200 + $0x1e0] sm:$0xff]
        %v351 = vld [vmem:[%s200 + $0x1e8] sm:$0xff]
        %v352 = vld [vmem:[%s200 + $0x1f0] sm:$0xff]
        %v353 = vld [vmem:[%s200 + $0x1f8] sm:$0xff]
        %v354 = vld [vmem:[%s200 + $0x200] sm:$0xff]
        %v355 = vld [vmem:[%s200 + $0x208] sm:$0xff]
        %v356 = vld [vmem:[%s200 + $0x210] sm:$0xff]
        %v357 = vld [vmem:[%s200 + $0x218] sm:$0xff]
        %v358 = vld [vmem:[%s200 + $0x220] sm:$0xff]
        %v359 = vld [vmem:[%s200 + $0x228] sm:$0xff]
        %v360 = vld [vmem:[%s200 + $0x230] sm:$0xff]
        %v361 = vld [vmem:[%s200 + $0x238] sm:$0xff]
        %v362 = vld [vmem:[%s200 + $0x240] sm:$0xff]
        %v363 = vld [vmem:[%s200 + $0x248] sm:$0xff]
        %v364 = vld [vmem:[%s200 + $0x250] sm:$0xff]
        %v365 = vld [vmem:[%s200 + $0x258] sm:$0xff]
        %v366 = vld [vmem:[%s200 + $0x260] sm:$0xff]
        %v367 = vld [vmem:[%s200 + $0x268] sm:$0xff]
        %v368 = vld [vmem:[%s200 + $0x270] sm:$0xff]
        %v369 = vld [vmem:[%s200 + $0x278] sm:$0xff]
        %v370 = vld [vmem:[%s200 + $0x280] sm:$0xff]
        %v371 = vld [vmem:[%s200 + $0x288] sm:$0xff]
        %v372 = vld [vmem:[%s200 + $0x290] sm:$0xff]
        %v373 = vld [vmem:[%s200 + $0x298] sm:$0xff]
        %v374 = vld [vmem:[%s200 + $0x2a0] sm:$0xff]
        %v375 = vld [vmem:[%s200 + $0x2a8] sm:$0xff]
        %v376 = vld [vmem:[%s200 + $0x2b0] sm:$0xff]
        %v377 = vld [vmem:[%s200 + $0x2b8] sm:$0xff]
        %v378 = vld [vmem:[%s200 + $0x2c0] sm:$0xff]
        %v379 = vld [vmem:[%s200 + $0x2c8] sm:$0xff]
        %v380 = vld [vmem:[%s200 + $0x2d0] sm:$0xff]
        %v381 = vld [vmem:[%s200 + $0x2d8] sm:$0xff]
        %v382 = vld [vmem:[%s200 + $0x2e0] sm:$0xff]
        %v383 = vld [vmem:[%s200 + $0x2e8] sm:$0xff]
        %v384 = vld [vmem:[%s200 + $0x2f0] sm:$0xff]
        %v385 = vld [vmem:[%s200 + $0x2f8] sm:$0xff]
        %v386 = vld [vmem:[%s200 + $0x300] sm:$0xff]
        %v387 = vld [vmem:[%s200 + $0x308] sm:$0xff]
        %v388 = vld [vmem:[%s200 + $0x310] sm:$0xff]
        %v389 = vld [vmem:[%s200 + $0x318] sm:$0xff]
        %v390 = vld [vmem:[%s200 + $0x320] sm:$0xff]
        %v391 = vld [vmem:[%s200 + $0x328] sm:$0xff]
        %v392 = vld [vmem:[%s200 + $0x330] sm:$0xff]
        %v393 = vld [vmem:[%s200 + $0x338] sm:$0xff]
        %v394 = vld [vmem:[%s200 + $0x340] sm:$0xff]
        %v395 = vld [vmem:[%s200 + $0x348] sm:$0xff]
        %v396 = vld [vmem:[%s200 + $0x350] sm:$0xff]
        %v397 = vld [vmem:[%s200 + $0x358] sm:$0xff]
        %v398 = vld [vmem:[%s200 + $0x360] sm:$0xff]
        %v399 = vld [vmem:[%s200 + $0x368] sm:$0xff]
        %v400 = vld [vmem:[%s200 + $0x370] sm:$0xff]
        %v401 = vld [vmem:[%s200 + $0x378] sm:$0xff]
        %v402 = vld [vmem:[%s200 + $0x380] sm:$0xff]
        %v403 = vld [vmem:[%s200 + $0x388] sm:$0xff]
        %v404 = vld [vmem:[%s200 + $0x390] sm:$0xff]
        %v405 = vld [vmem:[%s200 + $0x398] sm:$0xff]
        %v406 = vld [vmem:[%s200 + $0x3a0] sm:$0xff]
        %v407 = vld [vmem:[%s200 + $0x3a8] sm:$0xff]
        %v408 = vld [vmem:[%s200 + $0x3b0] sm:$0xff]
        %v409 = vld [vmem:[%s200 + $0x3b8] sm:$0xff]
        %v410 = vld [vmem:[%s200 + $0x3c0] sm:$0xff]
        %v411 = vld [vmem:[%s200 + $0x3c8] sm:$0xff]
        %v412 = vld [vmem:[%s200 + $0x3d0] sm:$0xff]
        %v413 = vld [vmem:[%s200 + $0x3d8] sm:$0xff]
        %v414 = vld [vmem:[%s200 + $0x3e0] sm:$0xff]
        %v415 = vld [vmem:[%s200 + $0x3e8] sm:$0xff]
        %v416 = vld [vmem:[%s200 + $0x3f0] sm:$0xff]
        %v417 = vld [vmem:[%s200 + $0x3f8] sm:$0xff]
        %v418 = vld [vmem:[%s200 + $0x400] sm:$0xff]
        %v419 = vld [vmem:[%s200 + $0x408] sm:$0xff]
        %v420 = vld [vmem:[%s200 + $0x410] sm:$0xff]
        %v421 = vld [vmem:[%s200 + $0x418] sm:$0xff]
        %v422 = vld [vmem:[%s200 + $0x420] sm:$0xff]
        %v423 = vld [vmem:[%s200 + $0x428] sm:$0xff]
        %v424 = vld [vmem:[%s200 + $0x430] sm:$0xff]
        %v425 = vld [vmem:[%s200 + $0x438] sm:$0xff]
        %v426 = vld [vmem:[%s200 + $0x440] sm:$0xff]
        %v427 = vld [vmem:[%s200 + $0x448] sm:$0xff]
        %v428 = vld [vmem:[%s200 + $0x450] sm:$0xff]
        %v429 = vld [vmem:[%s200 + $0x458] sm:$0xff]
        %v430 = vld [vmem:[%s200 + $0x460] sm:$0xff]
        %v431 = vld [vmem:[%s200 + $0x468] sm:$0xff]
        %v432 = vld [vmem:[%s200 + $0x470] sm:$0xff]
        %v433 = vld [vmem:[%s200 + $0x478] sm:$0xff]
        %v434 = vld [vmem:[%s200 + $0x480] sm:$0xff]
        %v435 = vld [vmem:[%s200 + $0x488] sm:$0xff]
        %v436 = vld [vmem:[%s200 + $0x490] sm:$0xff]
        %v437 = vld [vmem:[%s200 + $0x498] sm:$0xff]
        %v438 = vld [vmem:[%s200 + $0x4a0] sm:$0xff]
        %v439 = vld [vmem:[%s200 + $0x4a8] sm:$0xff]
        %v440 = vld [vmem:[%s200 + $0x4b0] sm:$0xff]
        %v441 = vld [vmem:[%s200 + $0x4b8] sm:$0xff]
        %v442 = vld [vmem:[%s200 + $0x4c0] sm:$0xff]
        %v443 = vld [vmem:[%s200 + $0x4c8] sm:$0xff]
        %v444 = vld [vmem:[%s200 + $0x4d0] sm:$0xff]
        %v445 = vld [vmem:[%s200 + $0x4d8] sm:$0xff]
        %v446 = vld [vmem:[%s200 + $0x4e0] sm:$0xff]
        %v447 = vld [vmem:[%s200 + $0x4e8] sm:$0xff]
        %v448 = vld [vmem:[%s200 + $0x4f0] sm:$0xff]
        %v449 = vld [vmem:[%s200 + $0x4f8] sm:$0xff]
        %v450 = vld [vmem:[%s200 + $0x500] sm:$0xff]
        %v451 = vld [vmem:[%s200 + $0x508] sm:$0xff]
        %v452 = vld [vmem:[%s200 + $0x510] sm:$0xff]
        %v453 = vld [vmem:[%s200 + $0x518] sm:$0xff]
        %v454 = vld [vmem:[%s200 + $0x520] sm:$0xff]
        %v455 = vld [vmem:[%s200 + $0x528] sm:$0xff]
        %v456 = vld [vmem:[%s200 + $0x530] sm:$0xff]
        %v457 = vld [vmem:[%s200 + $0x538] sm:$0xff]
        %v458 = vld [vmem:[%s200 + $0x540] sm:$0xff]
        %v459 = vld [vmem:[%s200 + $0x548] sm:$0xff]
        %v460 = vld [vmem:[%s200 + $0x550] sm:$0xff]
        %v461 = vld [vmem:[%s200 + $0x558] sm:$0xff]
        %v462 = vld [vmem:[%s200 + $0x560] sm:$0xff]
        %v463 = vld [vmem:[%s200 + $0x568] sm:$0xff]
        %v464 = vld [vmem:[%s200 + $0x570] sm:$0xff]
        %v465 = vld [vmem:[%s200 + $0x578] sm:$0xff]
        %v466 = vld [vmem:[%s200 + $0x580] sm:$0xff]
        %v467 = vld [vmem:[%s200 + $0x588] sm:$0xff]
        %v468 = vld [vmem:[%s200 + $0x590] sm:$0xff]
        %v469 = vld [vmem:[%s200 + $0x598] sm:$0xff]
        %v470 = vld [vmem:[%s200 + $0x5a0] sm:$0xff]
        %v471 = vld [vmem:[%s200 + $0x5a8] sm:$0xff]
        %v472 = vld [vmem:[%s200 + $0x5b0] sm:$0xff]
        %v473 = vld [vmem:[%s200 + $0x5b8] sm:$0xff]
        %v474 = vld [vmem:[%s200 + $0x5c0] sm:$0xff]
        %v475 = vld [vmem:[%s200 + $0x5c8] sm:$0xff]
        %v476 = vld [vmem:[%s200 + $0x5d0] sm:$0xff]
        %v477 = vld [vmem:[%s200 + $0x5d8] sm:$0xff]
        %v478 = vld [vmem:[%s200 + $0x5e0] sm:$0xff]
        %v479 = vld [vmem:[%s200 + $0x5e8] sm:$0xff]
        %v480 = vld [vmem:[%s200 + $0x5f0] sm:$0xff]
        %v481 = vld [vmem:[%s200 + $0x5f8] sm:$0xff]
        %v482 = vld [vmem:[%s200 + $0x600] sm:$0xff]
        %v483 = vld [vmem:[%s200 + $0x608] sm:$0xff]
        %v484 = vld [vmem:[%s200 + $0x610] sm:$0xff]
        %v485 = vld [vmem:[%s200 + $0x618] sm:$0xff]
        %v486 = vld [vmem:[%s200 + $0x620] sm:$0xff]
        %v487 = vld [vmem:[%s200 + $0x628] sm:$0xff]
        %v488 = vld [vmem:[%s200 + $0x630] sm:$0xff]
        %v489 = vld [vmem:[%s200 + $0x638] sm:$0xff]
        %v490 = vld [vmem:[%s200 + $0x640] sm:$0xff]
        %v491 = vld [vmem:[%s200 + $0x648] sm:$0xff]
        %v492 = vld [vmem:[%s200 + $0x650] sm:$0xff]
        %v493 = vld [vmem:[%s200 + $0x658] sm:$0xff]
        %v494 = vld [vmem:[%s200 + $0x660] sm:$0xff]
        %v495 = vld [vmem:[%s200 + $0x668] sm:$0xff]
        %v496 = vld [vmem:[%s200 + $0x670] sm:$0xff]
        %v497 = vld [vmem:[%s200 + $0x678] sm:$0xff]
        %v498 = vld [vmem:[%s200 + $0x680] sm:$0xff]
        %v499 = vld [vmem:[%s200 + $0x688] sm:$0xff]
        %v500 = vld [vmem:[%s200 + $0x690] sm:$0xff]
        %v501 = vld [vmem:[%s200 + $0x698] sm:$0xff]
        %v502 = vld [vmem:[%s200 + $0x6a0] sm:$0xff]
        %v503 = vld [vmem:[%s200 + $0x6a8] sm:$0xff]
        %v504 = vld [vmem:[%s200 + $0x6b0] sm:$0xff]
        %v505 = vld [vmem:[%s200 + $0x6b8] sm:$0xff]
        %v506 = vld [vmem:[%s200 + $0x6c0] sm:$0xff]
        %v507 = vld [vmem:[%s200 + $0x6c8] sm:$0xff]
        %v508 = vld [vmem:[%s200 + $0x6d0] sm:$0xff]
        %v509 = vld [vmem:[%s200 + $0x6d8] sm:$0xff]
        %v510 = vld [vmem:[%s200 + $0x6e0] sm:$0xff]
        %v511 = vld [vmem:[%s200 + $0x6e8] sm:$0xff]
        %v512 = vld [vmem:[%s200 + $0x6f0] sm:$0xff]
        %v513 = vld [vmem:[%s200 + $0x6f8] sm:$0xff]
        %v514 = vld [vmem:[%s200 + $0x700] sm:$0xff]
        %v515 = vld [vmem:[%s200 + $0x708] sm:$0xff]
        %v516 = vld [vmem:[%s200 + $0x710] sm:$0xff]
        %v517 = vld [vmem:[%s200 + $0x718] sm:$0xff]
        %v518 = vld [vmem:[%s200 + $0x720] sm:$0xff]
        %v519 = vld [vmem:[%s200 + $0x728] sm:$0xff]
        %v520 = vld [vmem:[%s200 + $0x730] sm:$0xff]
        %v521 = vld [vmem:[%s200 + $0x738] sm:$0xff]
        %v522 = vld [vmem:[%s200 + $0x740] sm:$0xff]
        %v523 = vld [vmem:[%s200 + $0x748] sm:$0xff]
        %v524 = vld [vmem:[%s200 + $0x750] sm:$0xff]
        %v525 = vld [vmem:[%s200 + $0x758] sm:$0xff]
        %v526 = vld [vmem:[%s200 + $0x760] sm:$0xff]
        %v527 = vld [vmem:[%s200 + $0x768] sm:$0xff]
        %v528 = vld [vmem:[%s200 + $0x770] sm:$0xff]
        %v529 = vld [vmem:[%s200 + $0x778] sm:$0xff]
        %v530 = vld [vmem:[%s200 + $0x780] sm:$0xff]
        %v531 = vld [vmem:[%s200 + $0x788] sm:$0xff]
        %v532 = vld [vmem:[%s200 + $0x790] sm:$0xff]
        %v533 = vld [vmem:[%s200 + $0x798] sm:$0xff]
        %v534 = vld [vmem:[%s200 + $0x7a0] sm:$0xff]
        %v535 = vld [vmem:[%s200 + $0x7a8] sm:$0xff]
        %v536 = vld [vmem:[%s200 + $0x7b0] sm:$0xff]
        %v537 = vld [vmem:[%s200 + $0x7b8] sm:$0xff]
        %v538 = vld [vmem:[%s200 + $0x7c0] sm:$0xff]
        %v539 = vld [vmem:[%s200 + $0x7c8] sm:$0xff]
        %v540 = vld [vmem:[%s200 + $0x7d0] sm:$0xff]
        %v541 = vld [vmem:[%s200 + $0x7d8] sm:$0xff]
        %v542 = vld [vmem:[%s200 + $0x7e0] sm:$0xff]
        %v543 = vld [vmem:[%s200 + $0x7e8] sm:$0xff]
        %v544 = vld [vmem:[%s200 + $0x7f0] sm:$0xff]
        %v545 = vld [vmem:[%s200 + $0x7f8] sm:$0xff]
        %v546 = vld [vmem:[%s209] sm:$0xf]
        %v803 = vunpack.c.l.b16 %v290
        %v804 = vunpack.c.h.b16 %v290
        %v805 = vunpack.c.l.b16 %v291
        %v806 = vunpack.c.h.b16 %v291
        %v807 = vunpack.c.l.b16 %v292
        %v808 = vunpack.c.h.b16 %v292
        %v809 = vunpack.c.l.b16 %v293
        %v810 = vunpack.c.h.b16 %v293
        %v811 = vunpack.c.l.b16 %v294
        %v812 = vunpack.c.h.b16 %v294
        %v813 = vunpack.c.l.b16 %v295
        %v814 = vunpack.c.h.b16 %v295
        %v815 = vunpack.c.l.b16 %v296
        %v816 = vunpack.c.h.b16 %v296
        %v817 = vunpack.c.l.b16 %v297
        %v818 = vunpack.c.h.b16 %v297
        %v819 = vunpack.c.l.b16 %v298
        %v820 = vunpack.c.h.b16 %v298
        %v821 = vunpack.c.l.b16 %v299
        %v822 = vunpack.c.h.b16 %v299
        %v823 = vunpack.c.l.b16 %v300
        %v824 = vunpack.c.h.b16 %v300
        %v825 = vunpack.c.l.b16 %v301
        %v826 = vunpack.c.h.b16 %v301
        %v827 = vunpack.c.l.b16 %v302
        %v828 = vunpack.c.h.b16 %v302
        %v829 = vunpack.c.l.b16 %v303
        %v830 = vunpack.c.h.b16 %v303
        %v831 = vunpack.c.l.b16 %v304
        %v832 = vunpack.c.h.b16 %v304
        %v833 = vunpack.c.l.b16 %v305
        %v834 = vunpack.c.h.b16 %v305
        %v835 = vunpack.c.l.b16 %v306
        %v836 = vunpack.c.h.b16 %v306
        %v837 = vunpack.c.l.b16 %v307
        %v838 = vunpack.c.h.b16 %v307
        %v839 = vunpack.c.l.b16 %v308
        %v840 = vunpack.c.h.b16 %v308
        %v841 = vunpack.c.l.b16 %v309
        %v842 = vunpack.c.h.b16 %v309
        %v843 = vunpack.c.l.b16 %v310
        %v844 = vunpack.c.h.b16 %v310
        %v845 = vunpack.c.l.b16 %v311
        %v846 = vunpack.c.h.b16 %v311
        %v847 = vunpack.c.l.b16 %v312
        %v848 = vunpack.c.h.b16 %v312
        %v849 = vunpack.c.l.b16 %v313
        %v850 = vunpack.c.h.b16 %v313
        %v851 = vunpack.c.l.b16 %v314
        %v852 = vunpack.c.h.b16 %v314
        %v853 = vunpack.c.l.b16 %v315
        %v854 = vunpack.c.h.b16 %v315
        %v855 = vunpack.c.l.b16 %v316
        %v856 = vunpack.c.h.b16 %v316
        %v857 = vunpack.c.l.b16 %v317
        %v858 = vunpack.c.h.b16 %v317
        %v859 = vunpack.c.l.b16 %v318
        %v860 = vunpack.c.h.b16 %v318
        %v861 = vunpack.c.l.b16 %v319
        %v862 = vunpack.c.h.b16 %v319
        %v863 = vunpack.c.l.b16 %v320
        %v864 = vunpack.c.h.b16 %v320
        %v865 = vunpack.c.l.b16 %v321
        %v866 = vunpack.c.h.b16 %v321
        %v867 = vunpack.c.l.b16 %v322
        %v868 = vunpack.c.h.b16 %v322
        %v869 = vunpack.c.l.b16 %v323
        %v870 = vunpack.c.h.b16 %v323
        %v871 = vunpack.c.l.b16 %v324
        %v872 = vunpack.c.h.b16 %v324
        %v873 = vunpack.c.l.b16 %v325
        %v874 = vunpack.c.h.b16 %v325
        %v875 = vunpack.c.l.b16 %v326
        %v876 = vunpack.c.h.b16 %v326
        %v877 = vunpack.c.l.b16 %v327
        %v878 = vunpack.c.h.b16 %v327
        %v879 = vunpack.c.l.b16 %v328
        %v880 = vunpack.c.h.b16 %v328
        %v881 = vunpack.c.l.b16 %v329
        %v882 = vunpack.c.h.b16 %v329
        %v883 = vunpack.c.l.b16 %v330
        %v884 = vunpack.c.h.b16 %v330
        %v885 = vunpack.c.l.b16 %v331
        %v886 = vunpack.c.h.b16 %v331
        %v887 = vunpack.c.l.b16 %v332
        %v888 = vunpack.c.h.b16 %v332
        %v889 = vunpack.c.l.b16 %v333
        %v890 = vunpack.c.h.b16 %v333
        %v891 = vunpack.c.l.b16 %v334
        %v892 = vunpack.c.h.b16 %v334
        %v893 = vunpack.c.l.b16 %v335
        %v894 = vunpack.c.h.b16 %v335
        %v895 = vunpack.c.l.b16 %v336
        %v896 = vunpack.c.h.b16 %v336
        %v897 = vunpack.c.l.b16 %v337
        %v898 = vunpack.c.h.b16 %v337
        %v899 = vunpack.c.l.b16 %v338
        %v900 = vunpack.c.h.b16 %v338
        %v901 = vunpack.c.l.b16 %v339
        %v902 = vunpack.c.h.b16 %v339
        %v903 = vunpack.c.l.b16 %v340
        %v904 = vunpack.c.h.b16 %v340
        %v905 = vunpack.c.l.b16 %v341
        %v906 = vunpack.c.h.b16 %v341
        %v907 = vunpack.c.l.b16 %v342
        %v908 = vunpack.c.h.b16 %v342
        %v909 = vunpack.c.l.b16 %v343
        %v910 = vunpack.c.h.b16 %v343
        %v911 = vunpack.c.l.b16 %v344
        %v912 = vunpack.c.h.b16 %v344
        %v913 = vunpack.c.l.b16 %v345
        %v914 = vunpack.c.h.b16 %v345
        %v915 = vunpack.c.l.b16 %v346
        %v916 = vunpack.c.h.b16 %v346
        %v917 = vunpack.c.l.b16 %v347
        %v918 = vunpack.c.h.b16 %v347
        %v919 = vunpack.c.l.b16 %v348
        %v920 = vunpack.c.h.b16 %v348
        %v921 = vunpack.c.l.b16 %v349
        %v922 = vunpack.c.h.b16 %v349
        %v923 = vunpack.c.l.b16 %v350
        %v924 = vunpack.c.h.b16 %v350
        %v925 = vunpack.c.l.b16 %v351
        %v926 = vunpack.c.h.b16 %v351
        %v927 = vunpack.c.l.b16 %v352
        %v928 = vunpack.c.h.b16 %v352
        %v929 = vunpack.c.l.b16 %v353
        %v930 = vunpack.c.h.b16 %v353
        %v931 = vunpack.c.l.b16 %v354
        %v932 = vunpack.c.h.b16 %v354
        %v933 = vunpack.c.l.b16 %v355
        %v934 = vunpack.c.h.b16 %v355
        %v935 = vunpack.c.l.b16 %v356
        %v936 = vunpack.c.h.b16 %v356
        %v937 = vunpack.c.l.b16 %v357
        %v938 = vunpack.c.h.b16 %v357
        %v939 = vunpack.c.l.b16 %v358
        %v940 = vunpack.c.h.b16 %v358
        %v941 = vunpack.c.l.b16 %v359
        %v942 = vunpack.c.h.b16 %v359
        %v943 = vunpack.c.l.b16 %v360
        %v944 = vunpack.c.h.b16 %v360
        %v945 = vunpack.c.l.b16 %v361
        %v946 = vunpack.c.h.b16 %v361
        %v947 = vunpack.c.l.b16 %v362
        %v948 = vunpack.c.h.b16 %v362
        %v949 = vunpack.c.l.b16 %v363
        %v950 = vunpack.c.h.b16 %v363
        %v951 = vunpack.c.l.b16 %v364
        %v952 = vunpack.c.h.b16 %v364
        %v953 = vunpack.c.l.b16 %v365
        %v954 = vunpack.c.h.b16 %v365
        %v955 = vunpack.c.l.b16 %v366
        %v956 = vunpack.c.h.b16 %v366
        %v957 = vunpack.c.l.b16 %v367
        %v958 = vunpack.c.h.b16 %v367
        %v959 = vunpack.c.l.b16 %v368
        %v960 = vunpack.c.h.b16 %v368
        %v961 = vunpack.c.l.b16 %v369
        %v962 = vunpack.c.h.b16 %v369
        %v963 = vunpack.c.l.b16 %v370
        %v964 = vunpack.c.h.b16 %v370
        %v965 = vunpack.c.l.b16 %v371
        %v966 = vunpack.c.h.b16 %v371
        %v967 = vunpack.c.l.b16 %v372
        %v968 = vunpack.c.h.b16 %v372
        %v969 = vunpack.c.l.b16 %v373
        %v970 = vunpack.c.h.b16 %v373
        %v971 = vunpack.c.l.b16 %v374
        %v972 = vunpack.c.h.b16 %v374
        %v973 = vunpack.c.l.b16 %v375
        %v974 = vunpack.c.h.b16 %v375
        %v975 = vunpack.c.l.b16 %v376
        %v976 = vunpack.c.h.b16 %v376
        %v977 = vunpack.c.l.b16 %v377
        %v978 = vunpack.c.h.b16 %v377
        %v979 = vunpack.c.l.b16 %v378
        %v980 = vunpack.c.h.b16 %v378
        %v981 = vunpack.c.l.b16 %v379
        %v982 = vunpack.c.h.b16 %v379
        %v983 = vunpack.c.l.b16 %v380
        %v984 = vunpack.c.h.b16 %v380
        %v985 = vunpack.c.l.b16 %v381
        %v986 = vunpack.c.h.b16 %v381
        %v987 = vunpack.c.l.b16 %v382
        %v988 = vunpack.c.h.b16 %v382
        %v989 = vunpack.c.l.b16 %v383
        %v990 = vunpack.c.h.b16 %v383
        %v991 = vunpack.c.l.b16 %v384
        %v992 = vunpack.c.h.b16 %v384
        %v993 = vunpack.c.l.b16 %v385
        %v994 = vunpack.c.h.b16 %v385
        %v995 = vunpack.c.l.b16 %v386
        %v996 = vunpack.c.h.b16 %v386
        %v997 = vunpack.c.l.b16 %v387
        %v998 = vunpack.c.h.b16 %v387
        %v999 = vunpack.c.l.b16 %v388
        %v1000 = vunpack.c.h.b16 %v388
        %v1001 = vunpack.c.l.b16 %v389
        %v1002 = vunpack.c.h.b16 %v389
        %v1003 = vunpack.c.l.b16 %v390
        %v1004 = vunpack.c.h.b16 %v390
        %v1005 = vunpack.c.l.b16 %v391
        %v1006 = vunpack.c.h.b16 %v391
        %v1007 = vunpack.c.l.b16 %v392
        %v1008 = vunpack.c.h.b16 %v392
        %v1009 = vunpack.c.l.b16 %v393
        %v1010 = vunpack.c.h.b16 %v393
        %v1011 = vunpack.c.l.b16 %v394
        %v1012 = vunpack.c.h.b16 %v394
        %v1013 = vunpack.c.l.b16 %v395
        %v1014 = vunpack.c.h.b16 %v395
        %v1015 = vunpack.c.l.b16 %v396
        %v1016 = vunpack.c.h.b16 %v396
        %v1017 = vunpack.c.l.b16 %v397
        %v1018 = vunpack.c.h.b16 %v397
        %v1019 = vunpack.c.l.b16 %v398
        %v1020 = vunpack.c.h.b16 %v398
        %v1021 = vunpack.c.l.b16 %v399
        %v1022 = vunpack.c.h.b16 %v399
        %v1023 = vunpack.c.l.b16 %v400
        %v1024 = vunpack.c.h.b16 %v400
        %v1025 = vunpack.c.l.b16 %v401
        %v1026 = vunpack.c.h.b16 %v401
        %v1027 = vunpack.c.l.b16 %v402
        %v1028 = vunpack.c.h.b16 %v402
        %v1029 = vunpack.c.l.b16 %v403
        %v1030 = vunpack.c.h.b16 %v403
        %v1031 = vunpack.c.l.b16 %v404
        %v1032 = vunpack.c.h.b16 %v404
        %v1033 = vunpack.c.l.b16 %v405
        %v1034 = vunpack.c.h.b16 %v405
        %v1035 = vunpack.c.l.b16 %v406
        %v1036 = vunpack.c.h.b16 %v406
        %v1037 = vunpack.c.l.b16 %v407
        %v1038 = vunpack.c.h.b16 %v407
        %v1039 = vunpack.c.l.b16 %v408
        %v1040 = vunpack.c.h.b16 %v408
        %v1041 = vunpack.c.l.b16 %v409
        %v1042 = vunpack.c.h.b16 %v409
        %v1043 = vunpack.c.l.b16 %v410
        %v1044 = vunpack.c.h.b16 %v410
        %v1045 = vunpack.c.l.b16 %v411
        %v1046 = vunpack.c.h.b16 %v411
        %v1047 = vunpack.c.l.b16 %v412
        %v1048 = vunpack.c.h.b16 %v412
        %v1049 = vunpack.c.l.b16 %v413
        %v1050 = vunpack.c.h.b16 %v413
        %v1051 = vunpack.c.l.b16 %v414
        %v1052 = vunpack.c.h.b16 %v414
        %v1053 = vunpack.c.l.b16 %v415
        %v1054 = vunpack.c.h.b16 %v415
        %v1055 = vunpack.c.l.b16 %v416
        %v1056 = vunpack.c.h.b16 %v416
        %v1057 = vunpack.c.l.b16 %v417
        %v1058 = vunpack.c.h.b16 %v417
        %v1059 = vunpack.c.l.b16 %v418
        %v1060 = vunpack.c.h.b16 %v418
        %v1061 = vunpack.c.l.b16 %v419
        %v1062 = vunpack.c.h.b16 %v419
        %v1063 = vunpack.c.l.b16 %v420
        %v1064 = vunpack.c.h.b16 %v420
        %v1065 = vunpack.c.l.b16 %v421
        %v1066 = vunpack.c.h.b16 %v421
        %v1067 = vunpack.c.l.b16 %v422
        %v1068 = vunpack.c.h.b16 %v422
        %v1069 = vunpack.c.l.b16 %v423
        %v1070 = vunpack.c.h.b16 %v423
        %v1071 = vunpack.c.l.b16 %v424
        %v1072 = vunpack.c.h.b16 %v424
        %v1073 = vunpack.c.l.b16 %v425
        %v1074 = vunpack.c.h.b16 %v425
        %v1075 = vunpack.c.l.b16 %v426
        %v1076 = vunpack.c.h.b16 %v426
        %v1077 = vunpack.c.l.b16 %v427
        %v1078 = vunpack.c.h.b16 %v427
        %v1079 = vunpack.c.l.b16 %v428
        %v1080 = vunpack.c.h.b16 %v428
        %v1081 = vunpack.c.l.b16 %v429
        %v1082 = vunpack.c.h.b16 %v429
        %v1083 = vunpack.c.l.b16 %v430
        %v1084 = vunpack.c.h.b16 %v430
        %v1085 = vunpack.c.l.b16 %v431
        %v1086 = vunpack.c.h.b16 %v431
        %v1087 = vunpack.c.l.b16 %v432
        %v1088 = vunpack.c.h.b16 %v432
        %v1089 = vunpack.c.l.b16 %v433
        %v1090 = vunpack.c.h.b16 %v433
        %v1091 = vunpack.c.l.b16 %v434
        %v1092 = vunpack.c.h.b16 %v434
        %v1093 = vunpack.c.l.b16 %v435
        %v1094 = vunpack.c.h.b16 %v435
        %v1095 = vunpack.c.l.b16 %v436
        %v1096 = vunpack.c.h.b16 %v436
        %v1097 = vunpack.c.l.b16 %v437
        %v1098 = vunpack.c.h.b16 %v437
        %v1099 = vunpack.c.l.b16 %v438
        %v1100 = vunpack.c.h.b16 %v438
        %v1101 = vunpack.c.l.b16 %v439
        %v1102 = vunpack.c.h.b16 %v439
        %v1103 = vunpack.c.l.b16 %v440
        %v1104 = vunpack.c.h.b16 %v440
        %v1105 = vunpack.c.l.b16 %v441
        %v1106 = vunpack.c.h.b16 %v441
        %v1107 = vunpack.c.l.b16 %v442
        %v1108 = vunpack.c.h.b16 %v442
        %v1109 = vunpack.c.l.b16 %v443
        %v1110 = vunpack.c.h.b16 %v443
        %v1111 = vunpack.c.l.b16 %v444
        %v1112 = vunpack.c.h.b16 %v444
        %v1113 = vunpack.c.l.b16 %v445
        %v1114 = vunpack.c.h.b16 %v445
        %v1115 = vunpack.c.l.b16 %v446
        %v1116 = vunpack.c.h.b16 %v446
        %v1117 = vunpack.c.l.b16 %v447
        %v1118 = vunpack.c.h.b16 %v447
        %v1119 = vunpack.c.l.b16 %v448
        %v1120 = vunpack.c.h.b16 %v448
        %v1121 = vunpack.c.l.b16 %v449
        %v1122 = vunpack.c.h.b16 %v449
        %v1123 = vunpack.c.l.b16 %v450
        %v1124 = vunpack.c.h.b16 %v450
        %v1125 = vunpack.c.l.b16 %v451
        %v1126 = vunpack.c.h.b16 %v451
        %v1127 = vunpack.c.l.b16 %v452
        %v1128 = vunpack.c.h.b16 %v452
        %v1129 = vunpack.c.l.b16 %v453
        %v1130 = vunpack.c.h.b16 %v453
        %v1131 = vunpack.c.l.b16 %v454
        %v1132 = vunpack.c.h.b16 %v454
        %v1133 = vunpack.c.l.b16 %v455
        %v1134 = vunpack.c.h.b16 %v455
        %v1135 = vunpack.c.l.b16 %v456
        %v1136 = vunpack.c.h.b16 %v456
        %v1137 = vunpack.c.l.b16 %v457
        %v1138 = vunpack.c.h.b16 %v457
        %v1139 = vunpack.c.l.b16 %v458
        %v1140 = vunpack.c.h.b16 %v458
        %v1141 = vunpack.c.l.b16 %v459
        %v1142 = vunpack.c.h.b16 %v459
        %v1143 = vunpack.c.l.b16 %v460
        %v1144 = vunpack.c.h.b16 %v460
        %v1145 = vunpack.c.l.b16 %v461
        %v1146 = vunpack.c.h.b16 %v461
        %v1147 = vunpack.c.l.b16 %v462
        %v1148 = vunpack.c.h.b16 %v462
        %v1149 = vunpack.c.l.b16 %v463
        %v1150 = vunpack.c.h.b16 %v463
        %v1151 = vunpack.c.l.b16 %v464
        %v1152 = vunpack.c.h.b16 %v464
        %v1153 = vunpack.c.l.b16 %v465
        %v1154 = vunpack.c.h.b16 %v465
        %v1155 = vunpack.c.l.b16 %v466
        %v1156 = vunpack.c.h.b16 %v466
        %v1157 = vunpack.c.l.b16 %v467
        %v1158 = vunpack.c.h.b16 %v467
        %v1159 = vunpack.c.l.b16 %v468
        %v1160 = vunpack.c.h.b16 %v468
        %v1161 = vunpack.c.l.b16 %v469
        %v1162 = vunpack.c.h.b16 %v469
        %v1163 = vunpack.c.l.b16 %v470
        %v1164 = vunpack.c.h.b16 %v470
        %v1165 = vunpack.c.l.b16 %v471
        %v1166 = vunpack.c.h.b16 %v471
        %v1167 = vunpack.c.l.b16 %v472
        %v1168 = vunpack.c.h.b16 %v472
        %v1169 = vunpack.c.l.b16 %v473
        %v1170 = vunpack.c.h.b16 %v473
        %v1171 = vunpack.c.l.b16 %v474
        %v1172 = vunpack.c.h.b16 %v474
        %v1173 = vunpack.c.l.b16 %v475
        %v1174 = vunpack.c.h.b16 %v475
        %v1175 = vunpack.c.l.b16 %v476
        %v1176 = vunpack.c.h.b16 %v476
        %v1177 = vunpack.c.l.b16 %v477
        %v1178 = vunpack.c.h.b16 %v477
        %v1179 = vunpack.c.l.b16 %v478
        %v1180 = vunpack.c.h.b16 %v478
        %v1181 = vunpack.c.l.b16 %v479
        %v1182 = vunpack.c.h.b16 %v479
        %v1183 = vunpack.c.l.b16 %v480
        %v1184 = vunpack.c.h.b16 %v480
        %v1185 = vunpack.c.l.b16 %v481
        %v1186 = vunpack.c.h.b16 %v481
        %v1187 = vunpack.c.l.b16 %v482
        %v1188 = vunpack.c.h.b16 %v482
        %v1189 = vunpack.c.l.b16 %v483
        %v1190 = vunpack.c.h.b16 %v483
        %v1191 = vunpack.c.l.b16 %v484
        %v1192 = vunpack.c.h.b16 %v484
        %v1193 = vunpack.c.l.b16 %v485
        %v1194 = vunpack.c.h.b16 %v485
        %v1195 = vunpack.c.l.b16 %v486
        %v1196 = vunpack.c.h.b16 %v486
        %v1197 = vunpack.c.l.b16 %v487
        %v1198 = vunpack.c.h.b16 %v487
        %v1199 = vunpack.c.l.b16 %v488
        %v1200 = vunpack.c.h.b16 %v488
        %v1201 = vunpack.c.l.b16 %v489
        %v1202 = vunpack.c.h.b16 %v489
        %v1203 = vunpack.c.l.b16 %v490
        %v1204 = vunpack.c.h.b16 %v490
        %v1205 = vunpack.c.l.b16 %v491
        %v1206 = vunpack.c.h.b16 %v491
        %v1207 = vunpack.c.l.b16 %v492
        %v1208 = vunpack.c.h.b16 %v492
        %v1209 = vunpack.c.l.b16 %v493
        %v1210 = vunpack.c.h.b16 %v493
        %v1211 = vunpack.c.l.b16 %v494
        %v1212 = vunpack.c.h.b16 %v494
        %v1213 = vunpack.c.l.b16 %v495
        %v1214 = vunpack.c.h.b16 %v495
        %v1215 = vunpack.c.l.b16 %v496
        %v1216 = vunpack.c.h.b16 %v496
        %v1217 = vunpack.c.l.b16 %v497
        %v1218 = vunpack.c.h.b16 %v497
        %v1219 = vunpack.c.l.b16 %v498
        %v1220 = vunpack.c.h.b16 %v498
        %v1221 = vunpack.c.l.b16 %v499
        %v1222 = vunpack.c.h.b16 %v499
        %v1223 = vunpack.c.l.b16 %v500
        %v1224 = vunpack.c.h.b16 %v500
        %v1225 = vunpack.c.l.b16 %v501
        %v1226 = vunpack.c.h.b16 %v501
        %v1227 = vunpack.c.l.b16 %v502
        %v1228 = vunpack.c.h.b16 %v502
        %v1229 = vunpack.c.l.b16 %v503
        %v1230 = vunpack.c.h.b16 %v503
        %v1231 = vunpack.c.l.b16 %v504
        %v1232 = vunpack.c.h.b16 %v504
        %v1233 = vunpack.c.l.b16 %v505
        %v1234 = vunpack.c.h.b16 %v505
        %v1235 = vunpack.c.l.b16 %v506
        %v1236 = vunpack.c.h.b16 %v506
        %v1237 = vunpack.c.l.b16 %v507
        %v1238 = vunpack.c.h.b16 %v507
        %v1239 = vunpack.c.l.b16 %v508
        %v1240 = vunpack.c.h.b16 %v508
        %v1241 = vunpack.c.l.b16 %v509
        %v1242 = vunpack.c.h.b16 %v509
        %v1243 = vunpack.c.l.b16 %v510
        %v1244 = vunpack.c.h.b16 %v510
        %v1245 = vunpack.c.l.b16 %v511
        %v1246 = vunpack.c.h.b16 %v511
        %v1247 = vunpack.c.l.b16 %v512
        %v1248 = vunpack.c.h.b16 %v512
        %v1249 = vunpack.c.l.b16 %v513
        %v1250 = vunpack.c.h.b16 %v513
        %v1251 = vunpack.c.l.b16 %v514
        %v1252 = vunpack.c.h.b16 %v514
        %v1253 = vunpack.c.l.b16 %v515
        %v1254 = vunpack.c.h.b16 %v515
        %v1255 = vunpack.c.l.b16 %v516
        %v1256 = vunpack.c.h.b16 %v516
        %v1257 = vunpack.c.l.b16 %v517
        %v1258 = vunpack.c.h.b16 %v517
        %v1259 = vunpack.c.l.b16 %v518
        %v1260 = vunpack.c.h.b16 %v518
        %v1261 = vunpack.c.l.b16 %v519
        %v1262 = vunpack.c.h.b16 %v519
        %v1263 = vunpack.c.l.b16 %v520
        %v1264 = vunpack.c.h.b16 %v520
        %v1265 = vunpack.c.l.b16 %v521
        %v1266 = vunpack.c.h.b16 %v521
        %v1267 = vunpack.c.l.b16 %v522
        %v1268 = vunpack.c.h.b16 %v522
        %v1269 = vunpack.c.l.b16 %v523
        %v1270 = vunpack.c.h.b16 %v523
        %v1271 = vunpack.c.l.b16 %v524
        %v1272 = vunpack.c.h.b16 %v524
        %v1273 = vunpack.c.l.b16 %v525
        %v1274 = vunpack.c.h.b16 %v525
        %v1275 = vunpack.c.l.b16 %v526
        %v1276 = vunpack.c.h.b16 %v526
        %v1277 = vunpack.c.l.b16 %v527
        %v1278 = vunpack.c.h.b16 %v527
        %v1279 = vunpack.c.l.b16 %v528
        %v1280 = vunpack.c.h.b16 %v528
        %v1281 = vunpack.c.l.b16 %v529
        %v1282 = vunpack.c.h.b16 %v529
        %v1283 = vunpack.c.l.b16 %v530
        %v1284 = vunpack.c.h.b16 %v530
        %v1285 = vunpack.c.l.b16 %v531
        %v1286 = vunpack.c.h.b16 %v531
        %v1287 = vunpack.c.l.b16 %v532
        %v1288 = vunpack.c.h.b16 %v532
        %v1289 = vunpack.c.l.b16 %v533
        %v1290 = vunpack.c.h.b16 %v533
        %v1291 = vunpack.c.l.b16 %v534
        %v1292 = vunpack.c.h.b16 %v534
        %v1293 = vunpack.c.l.b16 %v535
        %v1294 = vunpack.c.h.b16 %v535
        %v1295 = vunpack.c.l.b16 %v536
        %v1296 = vunpack.c.h.b16 %v536
        %v1297 = vunpack.c.l.b16 %v537
        %v1298 = vunpack.c.h.b16 %v537
        %v1299 = vunpack.c.l.b16 %v538
        %v1300 = vunpack.c.h.b16 %v538
        %v1301 = vunpack.c.l.b16 %v539
        %v1302 = vunpack.c.h.b16 %v539
        %v1303 = vunpack.c.l.b16 %v540
        %v1304 = vunpack.c.h.b16 %v540
        %v1305 = vunpack.c.l.b16 %v541
        %v1306 = vunpack.c.h.b16 %v541
        %v1307 = vunpack.c.l.b16 %v542
        %v1308 = vunpack.c.h.b16 %v542
        %v1309 = vunpack.c.l.b16 %v543
        %v1310 = vunpack.c.h.b16 %v543
        %v1311 = vunpack.c.l.b16 %v544
        %v1312 = vunpack.c.h.b16 %v544
        %v1313 = vunpack.c.l.b16 %v545
        %v1314 = vunpack.c.h.b16 %v545
        %v1315 = vpack.c.b16 %v807, %v803
        %v1316 = vpack.c.b16 %v808, %v804
        %v1317 = vpack.c.b16 %v809, %v805
        %v1318 = vpack.c.b16 %v810, %v806
        %v1319 = vpack.c.b16 %v815, %v811
        %v1320 = vpack.c.b16 %v816, %v812
        %v1321 = vpack.c.b16 %v817, %v813
        %v1322 = vpack.c.b16 %v818, %v814
        %v1323 = vpack.c.b16 %v823, %v819
        %v1324 = vpack.c.b16 %v824, %v820
        %v1325 = vpack.c.b16 %v825, %v821
        %v1326 = vpack.c.b16 %v826, %v822
        %v1327 = vpack.c.b16 %v831, %v827
        %v1328 = vpack.c.b16 %v832, %v828
        %v1329 = vpack.c.b16 %v833, %v829
        %v1330 = vpack.c.b16 %v834, %v830
        %v1331 = vpack.c.b16 %v839, %v835
        %v1332 = vpack.c.b16 %v840, %v836
        %v1333 = vpack.c.b16 %v841, %v837
        %v1334 = vpack.c.b16 %v842, %v838
        %v1335 = vpack.c.b16 %v847, %v843
        %v1336 = vpack.c.b16 %v848, %v844
        %v1337 = vpack.c.b16 %v849, %v845
        %v1338 = vpack.c.b16 %v850, %v846
        %v1339 = vpack.c.b16 %v855, %v851
        %v1340 = vpack.c.b16 %v856, %v852
        %v1341 = vpack.c.b16 %v857, %v853
        %v1342 = vpack.c.b16 %v858, %v854
        %v1343 = vpack.c.b16 %v863, %v859
        %v1344 = vpack.c.b16 %v864, %v860
        %v1345 = vpack.c.b16 %v865, %v861
        %v1346 = vpack.c.b16 %v866, %v862
        %v1347 = vpack.c.b16 %v871, %v867
        %v1348 = vpack.c.b16 %v872, %v868
        %v1349 = vpack.c.b16 %v873, %v869
        %v1350 = vpack.c.b16 %v874, %v870
        %v1351 = vpack.c.b16 %v879, %v875
        %v1352 = vpack.c.b16 %v880, %v876
        %v1353 = vpack.c.b16 %v881, %v877
        %v1354 = vpack.c.b16 %v882, %v878
        %v1355 = vpack.c.b16 %v887, %v883
        %v1356 = vpack.c.b16 %v888, %v884
        %v1357 = vpack.c.b16 %v889, %v885
        %v1358 = vpack.c.b16 %v890, %v886
        %v1359 = vpack.c.b16 %v895, %v891
        %v1360 = vpack.c.b16 %v896, %v892
        %v1361 = vpack.c.b16 %v897, %v893
        %v1362 = vpack.c.b16 %v898, %v894
        %v1363 = vpack.c.b16 %v903, %v899
        %v1364 = vpack.c.b16 %v904, %v900
        %v1365 = vpack.c.b16 %v905, %v901
        %v1366 = vpack.c.b16 %v906, %v902
        %v1367 = vpack.c.b16 %v911, %v907
        %v1368 = vpack.c.b16 %v912, %v908
        %v1369 = vpack.c.b16 %v913, %v909
        %v1370 = vpack.c.b16 %v914, %v910
        %v1371 = vpack.c.b16 %v919, %v915
        %v1372 = vpack.c.b16 %v920, %v916
        %v1373 = vpack.c.b16 %v921, %v917
        %v1374 = vpack.c.b16 %v922, %v918
        %v1375 = vpack.c.b16 %v927, %v923
        %v1376 = vpack.c.b16 %v928, %v924
        %v1377 = vpack.c.b16 %v929, %v925
        %v1378 = vpack.c.b16 %v930, %v926
        %v1379 = vpack.c.b16 %v935, %v931
        %v1380 = vpack.c.b16 %v936, %v932
        %v1381 = vpack.c.b16 %v937, %v933
        %v1382 = vpack.c.b16 %v938, %v934
        %v1383 = vpack.c.b16 %v943, %v939
        %v1384 = vpack.c.b16 %v944, %v940
        %v1385 = vpack.c.b16 %v945, %v941
        %v1386 = vpack.c.b16 %v946, %v942
        %v1387 = vpack.c.b16 %v951, %v947
        %v1388 = vpack.c.b16 %v952, %v948
        %v1389 = vpack.c.b16 %v953, %v949
        %v1390 = vpack.c.b16 %v954, %v950
        %v1391 = vpack.c.b16 %v959, %v955
        %v1392 = vpack.c.b16 %v960, %v956
        %v1393 = vpack.c.b16 %v961, %v957
        %v1394 = vpack.c.b16 %v962, %v958
        %v1395 = vpack.c.b16 %v967, %v963
        %v1396 = vpack.c.b16 %v968, %v964
        %v1397 = vpack.c.b16 %v969, %v965
        %v1398 = vpack.c.b16 %v970, %v966
        %v1399 = vpack.c.b16 %v975, %v971
        %v1400 = vpack.c.b16 %v976, %v972
        %v1401 = vpack.c.b16 %v977, %v973
        %v1402 = vpack.c.b16 %v978, %v974
        %v1403 = vpack.c.b16 %v983, %v979
        %v1404 = vpack.c.b16 %v984, %v980
        %v1405 = vpack.c.b16 %v985, %v981
        %v1406 = vpack.c.b16 %v986, %v982
        %v1407 = vpack.c.b16 %v991, %v987
        %v1408 = vpack.c.b16 %v992, %v988
        %v1409 = vpack.c.b16 %v993, %v989
        %v1410 = vpack.c.b16 %v994, %v990
        %v1411 = vpack.c.b16 %v999, %v995
        %v1412 = vpack.c.b16 %v1000, %v996
        %v1413 = vpack.c.b16 %v1001, %v997
        %v1414 = vpack.c.b16 %v1002, %v998
        %v1415 = vpack.c.b16 %v1007, %v1003
        %v1416 = vpack.c.b16 %v1008, %v1004
        %v1417 = vpack.c.b16 %v1009, %v1005
        %v1418 = vpack.c.b16 %v1010, %v1006
        %v1419 = vpack.c.b16 %v1015, %v1011
        %v1420 = vpack.c.b16 %v1016, %v1012
        %v1421 = vpack.c.b16 %v1017, %v1013
        %v1422 = vpack.c.b16 %v1018, %v1014
        %v1423 = vpack.c.b16 %v1023, %v1019
        %v1424 = vpack.c.b16 %v1024, %v1020
        %v1425 = vpack.c.b16 %v1025, %v1021
        %v1426 = vpack.c.b16 %v1026, %v1022
        %v1427 = vpack.c.b16 %v1031, %v1027
        %v1428 = vpack.c.b16 %v1032, %v1028
        %v1429 = vpack.c.b16 %v1033, %v1029
        %v1430 = vpack.c.b16 %v1034, %v1030
        %v1431 = vpack.c.b16 %v1039, %v1035
        %v1432 = vpack.c.b16 %v1040, %v1036
        %v1433 = vpack.c.b16 %v1041, %v1037
        %v1434 = vpack.c.b16 %v1042, %v1038
        %v1435 = vpack.c.b16 %v1047, %v1043
        %v1436 = vpack.c.b16 %v1048, %v1044
        %v1437 = vpack.c.b16 %v1049, %v1045
        %v1438 = vpack.c.b16 %v1050, %v1046
        %v1439 = vpack.c.b16 %v1055, %v1051
        %v1440 = vpack.c.b16 %v1056, %v1052
        %v1441 = vpack.c.b16 %v1057, %v1053
        %v1442 = vpack.c.b16 %v1058, %v1054
        %v1443 = vpack.c.b16 %v1063, %v1059
        %v1444 = vpack.c.b16 %v1064, %v1060
        %v1445 = vpack.c.b16 %v1065, %v1061
        %v1446 = vpack.c.b16 %v1066, %v1062
        %v1447 = vpack.c.b16 %v1071, %v1067
        %v1448 = vpack.c.b16 %v1072, %v1068
        %v1449 = vpack.c.b16 %v1073, %v1069
        %v1450 = vpack.c.b16 %v1074, %v1070
        %v1451 = vpack.c.b16 %v1079, %v1075
        %v1452 = vpack.c.b16 %v1080, %v1076
        %v1453 = vpack.c.b16 %v1081, %v1077
        %v1454 = vpack.c.b16 %v1082, %v1078
        %v1455 = vpack.c.b16 %v1087, %v1083
        %v1456 = vpack.c.b16 %v1088, %v1084
        %v1457 = vpack.c.b16 %v1089, %v1085
        %v1458 = vpack.c.b16 %v1090, %v1086
        %v1459 = vpack.c.b16 %v1095, %v1091
        %v1460 = vpack.c.b16 %v1096, %v1092
        %v1461 = vpack.c.b16 %v1097, %v1093
        %v1462 = vpack.c.b16 %v1098, %v1094
        %v1463 = vpack.c.b16 %v1103, %v1099
        %v1464 = vpack.c.b16 %v1104, %v1100
        %v1465 = vpack.c.b16 %v1105, %v1101
        %v1466 = vpack.c.b16 %v1106, %v1102
        %v1467 = vpack.c.b16 %v1111, %v1107
        %v1468 = vpack.c.b16 %v1112, %v1108
        %v1469 = vpack.c.b16 %v1113, %v1109
        %v1470 = vpack.c.b16 %v1114, %v1110
        %v1471 = vpack.c.b16 %v1119, %v1115
        %v1472 = vpack.c.b16 %v1120, %v1116
        %v1473 = vpack.c.b16 %v1121, %v1117
        %v1474 = vpack.c.b16 %v1122, %v1118
        %v1475 = vpack.c.b16 %v1127, %v1123
        %v1476 = vpack.c.b16 %v1128, %v1124
        %v1477 = vpack.c.b16 %v1129, %v1125
        %v1478 = vpack.c.b16 %v1130, %v1126
        %v1479 = vpack.c.b16 %v1135, %v1131
        %v1480 = vpack.c.b16 %v1136, %v1132
        %v1481 = vpack.c.b16 %v1137, %v1133
        %v1482 = vpack.c.b16 %v1138, %v1134
        %v1483 = vpack.c.b16 %v1143, %v1139
        %v1484 = vpack.c.b16 %v1144, %v1140
        %v1485 = vpack.c.b16 %v1145, %v1141
        %v1486 = vpack.c.b16 %v1146, %v1142
        %v1487 = vpack.c.b16 %v1151, %v1147
        %v1488 = vpack.c.b16 %v1152, %v1148
        %v1489 = vpack.c.b16 %v1153, %v1149
        %v1490 = vpack.c.b16 %v1154, %v1150
        %v1491 = vpack.c.b16 %v1159, %v1155
        %v1492 = vpack.c.b16 %v1160, %v1156
        %v1493 = vpack.c.b16 %v1161, %v1157
        %v1494 = vpack.c.b16 %v1162, %v1158
        %v1495 = vpack.c.b16 %v1167, %v1163
        %v1496 = vpack.c.b16 %v1168, %v1164
        %v1497 = vpack.c.b16 %v1169, %v1165
        %v1498 = vpack.c.b16 %v1170, %v1166
        %v1499 = vpack.c.b16 %v1175, %v1171
        %v1500 = vpack.c.b16 %v1176, %v1172
        %v1501 = vpack.c.b16 %v1177, %v1173
        %v1502 = vpack.c.b16 %v1178, %v1174
        %v1503 = vpack.c.b16 %v1183, %v1179
        %v1504 = vpack.c.b16 %v1184, %v1180
        %v1505 = vpack.c.b16 %v1185, %v1181
        %v1506 = vpack.c.b16 %v1186, %v1182
        %v1507 = vpack.c.b16 %v1191, %v1187
        %v1508 = vpack.c.b16 %v1192, %v1188
        %v1509 = vpack.c.b16 %v1193, %v1189
        %v1510 = vpack.c.b16 %v1194, %v1190
        %v1511 = vpack.c.b16 %v1199, %v1195
        %v1512 = vpack.c.b16 %v1200, %v1196
        %v1513 = vpack.c.b16 %v1201, %v1197
        %v1514 = vpack.c.b16 %v1202, %v1198
        %v1515 = vpack.c.b16 %v1207, %v1203
        %v1516 = vpack.c.b16 %v1208, %v1204
        %v1517 = vpack.c.b16 %v1209, %v1205
        %v1518 = vpack.c.b16 %v1210, %v1206
        %v1519 = vpack.c.b16 %v1215, %v1211
        %v1520 = vpack.c.b16 %v1216, %v1212
        %v1521 = vpack.c.b16 %v1217, %v1213
        %v1522 = vpack.c.b16 %v1218, %v1214
        %v1523 = vpack.c.b16 %v1223, %v1219
        %v1524 = vpack.c.b16 %v1224, %v1220
        %v1525 = vpack.c.b16 %v1225, %v1221
        %v1526 = vpack.c.b16 %v1226, %v1222
        %v1527 = vpack.c.b16 %v1231, %v1227
        %v1528 = vpack.c.b16 %v1232, %v1228
        %v1529 = vpack.c.b16 %v1233, %v1229
        %v1530 = vpack.c.b16 %v1234, %v1230
        %v1531 = vpack.c.b16 %v1239, %v1235
        %v1532 = vpack.c.b16 %v1240, %v1236
        %v1533 = vpack.c.b16 %v1241, %v1237
        %v1534 = vpack.c.b16 %v1242, %v1238
        %v1535 = vpack.c.b16 %v1247, %v1243
        %v1536 = vpack.c.b16 %v1248, %v1244
        %v1537 = vpack.c.b16 %v1249, %v1245
        %v1538 = vpack.c.b16 %v1250, %v1246
        %v1539 = vpack.c.b16 %v1255, %v1251
        %v1540 = vpack.c.b16 %v1256, %v1252
        %v1541 = vpack.c.b16 %v1257, %v1253
        %v1542 = vpack.c.b16 %v1258, %v1254
        %v1543 = vpack.c.b16 %v1263, %v1259
        %v1544 = vpack.c.b16 %v1264, %v1260
        %v1545 = vpack.c.b16 %v1265, %v1261
        %v1546 = vpack.c.b16 %v1266, %v1262
        %v1547 = vpack.c.b16 %v1271, %v1267
        %v1548 = vpack.c.b16 %v1272, %v1268
        %v1549 = vpack.c.b16 %v1273, %v1269
        %v1550 = vpack.c.b16 %v1274, %v1270
        %v1551 = vpack.c.b16 %v1279, %v1275
        %v1552 = vpack.c.b16 %v1280, %v1276
        %v1553 = vpack.c.b16 %v1281, %v1277
        %v1554 = vpack.c.b16 %v1282, %v1278
        %v1555 = vpack.c.b16 %v1287, %v1283
        %v1556 = vpack.c.b16 %v1288, %v1284
        %v1557 = vpack.c.b16 %v1289, %v1285
        %v1558 = vpack.c.b16 %v1290, %v1286
        %v1559 = vpack.c.b16 %v1295, %v1291
        %v1560 = vpack.c.b16 %v1296, %v1292
        %v1561 = vpack.c.b16 %v1297, %v1293
        %v1562 = vpack.c.b16 %v1298, %v1294
        %v1563 = vpack.c.b16 %v1303, %v1299
        %v1564 = vpack.c.b16 %v1304, %v1300
        %v1565 = vpack.c.b16 %v1305, %v1301
        %v1566 = vpack.c.b16 %v1306, %v1302
        %v1567 = vpack.c.b16 %v1311, %v1307
        %v1568 = vpack.c.b16 %v1312, %v1308
        %v1569 = vpack.c.b16 %v1313, %v1309
        %v1570 = vpack.c.b16 %v1314, %v1310
        %v1828 = vlaneseq
        %v1829 = vshrl.u32 %v1828, 7
        %v1830 = vsub.s32 0, %v1829
        %v1831 = vrot.slane %v546, %v1830
        %v1832 = vlaneseq
        %v1833 = vshrl.u32 %v1832, 7
        %v1834 = vsub.s32 1, %v1833
        %v1835 = vrot.slane %v546, %v1834
        %v1836 = vlaneseq
        %v1837 = vshrl.u32 %v1836, 7
        %v1838 = vsub.s32 2, %v1837
        %v1839 = vrot.slane %v546, %v1838
        %v1840 = vlaneseq
        %v1841 = vshrl.u32 %v1840, 7
        %v1842 = vsub.s32 3, %v1841
        %v1843 = vrot.slane %v546, %v1842
        %1848 = vmatprep.subr.bf16.mxu0 %v1316
        %1849 = vmatpush1.bf16.msra.mxu0 %v1315
        %1850 = vmatprep.subr.bf16.mxu0 %v1320
        %1851 = vmatpush1.bf16.msra.mxu0 %v1319
        %1852 = vmatprep.subr.bf16.mxu0 %v1324
        %1853 = vmatpush1.bf16.msra.mxu0 %v1323
        %1854 = vmatprep.subr.bf16.mxu0 %v1328
        %1855 = vmatpush1.bf16.msra.mxu0 %v1327
        %1856 = vmatprep.subr.bf16.mxu0 %v1332
        %1857 = vmatpush1.bf16.msra.mxu0 %v1331
        %1858 = vmatprep.subr.bf16.mxu0 %v1336
        %1859 = vmatpush1.bf16.msra.mxu0 %v1335
        %1860 = vmatprep.subr.bf16.mxu0 %v1340
        %1861 = vmatpush1.bf16.msra.mxu0 %v1339
        %1862 = vmatprep.subr.bf16.mxu0 %v1344
        %1863 = vmatpush1.bf16.msra.mxu0 %v1343
        %1864 = vmatprep.subr.bf16.mxu0 %v1348
        %1865 = vmatpush1.bf16.msra.mxu0 %v1347
        %1866 = vmatprep.subr.bf16.mxu0 %v1352
        %1867 = vmatpush1.bf16.msra.mxu0 %v1351
        %1868 = vmatprep.subr.bf16.mxu0 %v1356
        %1869 = vmatpush1.bf16.msra.mxu0 %v1355
        %1870 = vmatprep.subr.bf16.mxu0 %v1360
        %1871 = vmatpush1.bf16.msra.mxu0 %v1359
        %1872 = vmatprep.subr.bf16.mxu0 %v1364
        %1873 = vmatpush1.bf16.msra.mxu0 %v1363
        %1874 = vmatprep.subr.bf16.mxu0 %v1368
        %1875 = vmatpush1.bf16.msra.mxu0 %v1367
        %1876 = vmatprep.subr.bf16.mxu0 %v1372
        %1877 = vmatpush1.bf16.msra.mxu0 %v1371
        %1878 = vmatprep.subr.bf16.mxu0 %v1376
        %1879 = vmatpush1.bf16.msra.mxu0 %v1375
        %1880 = vmatprep.mubr.bf16.mxu0 %v283
        %1881 = vmatmul.mubr.bf16.gmra.mrb[0].mxu0 %v282
        %v1882 = vpop.f32.mrb[0].mxu0
        %v1883 = vadd.f32 %v1831, %v1882
        %v1884 = vpop.f32.mrb[0].mxu0
        %v1885 = vadd.f32 %v1835, %v1884
        %v1886 = vpop.f32.mrb[0].mxu0
        %v1887 = vpop.f32.mrb[0].mxu0
        %1888 = vdwg.mxu0
        %1889 = vmatprep.subr.bf16.mxu0 %v1380
        %1890 = vmatpush1.bf16.msra.mxu0 %v1379
        %1891 = vmatprep.subr.bf16.mxu0 %v1384
        %1892 = vmatpush1.bf16.msra.mxu0 %v1383
        %1893 = vmatprep.subr.bf16.mxu0 %v1388
        %1894 = vmatpush1.bf16.msra.mxu0 %v1387
        %1895 = vmatprep.subr.bf16.mxu0 %v1392
        %1896 = vmatpush1.bf16.msra.mxu0 %v1391
        %1897 = vmatprep.subr.bf16.mxu0 %v1396
        %1898 = vmatpush1.bf16.msra.mxu0 %v1395
        %1899 = vmatprep.subr.bf16.mxu0 %v1400
        %1900 = vmatpush1.bf16.msra.mxu0 %v1399
        %1901 = vmatprep.subr.bf16.mxu0 %v1404
        %1902 = vmatpush1.bf16.msra.mxu0 %v1403
        %1903 = vmatprep.subr.bf16.mxu0 %v1408
        %1904 = vmatpush1.bf16.msra.mxu0 %v1407
        %1905 = vmatprep.subr.bf16.mxu0 %v1412
        %1906 = vmatpush1.bf16.msra.mxu0 %v1411
        %1907 = vmatprep.subr.bf16.mxu0 %v1416
        %1908 = vmatpush1.bf16.msra.mxu0 %v1415
        %1909 = vmatprep.subr.bf16.mxu0 %v1420
        %1910 = vmatpush1.bf16.msra.mxu0 %v1419
        %1911 = vmatprep.subr.bf16.mxu0 %v1424
        %1912 = vmatpush1.bf16.msra.mxu0 %v1423
        %1913 = vmatprep.subr.bf16.mxu0 %v1428
        %1914 = vmatpush1.bf16.msra.mxu0 %v1427
        %1915 = vmatprep.subr.bf16.mxu0 %v1432
        %1916 = vmatpush1.bf16.msra.mxu0 %v1431
        %1917 = vmatprep.subr.bf16.mxu0 %v1436
        %1918 = vmatpush1.bf16.msra.mxu0 %v1435
        %1919 = vmatprep.subr.bf16.mxu0 %v1440
        %1920 = vmatpush1.bf16.msra.mxu0 %v1439
        %1921 = vmatprep.mubr.bf16.mxu0 %v285
        %1922 = vmatmul.mubr.bf16.gmra.mrb[0].mxu0 %v284
        %v1923 = vpop.f32.mrb[0].mxu0
        %v1924 = vadd.f32 %v1883, %v1923
        %v1925 = vpop.f32.mrb[0].mxu0
        %v1926 = vadd.f32 %v1885, %v1925
        %v1927 = vpop.f32.mrb[0].mxu0
        %v1928 = vpop.f32.mrb[0].mxu0
        %1929 = vdwg.mxu0
        %1930 = vmatprep.subr.bf16.mxu0 %v1444
        %1931 = vmatpush1.bf16.msra.mxu0 %v1443
        %1932 = vmatprep.subr.bf16.mxu0 %v1448
        %1933 = vmatpush1.bf16.msra.mxu0 %v1447
        %1934 = vmatprep.subr.bf16.mxu0 %v1452
        %1935 = vmatpush1.bf16.msra.mxu0 %v1451
        %1936 = vmatprep.subr.bf16.mxu0 %v1456
        %1937 = vmatpush1.bf16.msra.mxu0 %v1455
        %1938 = vmatprep.subr.bf16.mxu0 %v1460
        %1939 = vmatpush1.bf16.msra.mxu0 %v1459
        %1940 = vmatprep.subr.bf16.mxu0 %v1464
        %1941 = vmatpush1.bf16.msra.mxu0 %v1463
        %1942 = vmatprep.subr.bf16.mxu0 %v1468
        %1943 = vmatpush1.bf16.msra.mxu0 %v1467
        %1944 = vmatprep.subr.bf16.mxu0 %v1472
        %1945 = vmatpush1.bf16.msra.mxu0 %v1471
        %1946 = vmatprep.subr.bf16.mxu0 %v1476
        %1947 = vmatpush1.bf16.msra.mxu0 %v1475
        %1948 = vmatprep.subr.bf16.mxu0 %v1480
        %1949 = vmatpush1.bf16.msra.mxu0 %v1479
        %1950 = vmatprep.subr.bf16.mxu0 %v1484
        %1951 = vmatpush1.bf16.msra.mxu0 %v1483
        %1952 = vmatprep.subr.bf16.mxu0 %v1488
        %1953 = vmatpush1.bf16.msra.mxu0 %v1487
        %1954 = vmatprep.subr.bf16.mxu0 %v1492
        %1955 = vmatpush1.bf16.msra.mxu0 %v1491
        %1956 = vmatprep.subr.bf16.mxu0 %v1496
        %1957 = vmatpush1.bf16.msra.mxu0 %v1495
        %1958 = vmatprep.subr.bf16.mxu0 %v1500
        %1959 = vmatpush1.bf16.msra.mxu0 %v1499
        %1960 = vmatprep.subr.bf16.mxu0 %v1504
        %1961 = vmatpush1.bf16.msra.mxu0 %v1503
        %1962 = vmatprep.mubr.bf16.mxu0 %v287
        %1963 = vmatmul.mubr.bf16.gmra.mrb[0].mxu0 %v286
        %v1964 = vpop.f32.mrb[0].mxu0
        %v1965 = vadd.f32 %v1924, %v1964
        %v1966 = vpop.f32.mrb[0].mxu0
        %v1967 = vadd.f32 %v1926, %v1966
        %v1968 = vpop.f32.mrb[0].mxu0
        %v1969 = vpop.f32.mrb[0].mxu0
        %1970 = vdwg.mxu0
        %1971 = vmatprep.subr.bf16.mxu0 %v1508
        %1972 = vmatpush1.bf16.msra.mxu0 %v1507
        %1973 = vmatprep.subr.bf16.mxu0 %v1512
        %1974 = vmatpush1.bf16.msra.mxu0 %v1511
        %1975 = vmatprep.subr.bf16.mxu0 %v1516
        %1976 = vmatpush1.bf16.msra.mxu0 %v1515
        %1977 = vmatprep.subr.bf16.mxu0 %v1520
        %1978 = vmatpush1.bf16.msra.mxu0 %v1519
        %1979 = vmatprep.subr.bf16.mxu0 %v1524
        %1980 = vmatpush1.bf16.msra.mxu0 %v1523
        %1981 = vmatprep.subr.bf16.mxu0 %v1528
        %1982 = vmatpush1.bf16.msra.mxu0 %v1527
        %1983 = vmatprep.subr.bf16.mxu0 %v1532
        %1984 = vmatpush1.bf16.msra.mxu0 %v1531
        %1985 = vmatprep.subr.bf16.mxu0 %v1536
        %1986 = vmatpush1.bf16.msra.mxu0 %v1535
        %1987 = vmatprep.subr.bf16.mxu0 %v1540
        %1988 = vmatpush1.bf16.msra.mxu0 %v1539
        %1989 = vmatprep.subr.bf16.mxu0 %v1544
        %1990 = vmatpush1.bf16.msra.mxu0 %v1543
        %1991 = vmatprep.subr.bf16.mxu0 %v1548
        %1992 = vmatpush1.bf16.msra.mxu0 %v1547
        %1993 = vmatprep.subr.bf16.mxu0 %v1552
        %1994 = vmatpush1.bf16.msra.mxu0 %v1551
        %1995 = vmatprep.subr.bf16.mxu0 %v1556
        %1996 = vmatpush1.bf16.msra.mxu0 %v1555
        %1997 = vmatprep.subr.bf16.mxu0 %v1560
        %1998 = vmatpush1.bf16.msra.mxu0 %v1559
        %1999 = vmatprep.subr.bf16.mxu0 %v1564
        %2000 = vmatpush1.bf16.msra.mxu0 %v1563
        %2001 = vmatprep.subr.bf16.mxu0 %v1568
        %2002 = vmatpush1.bf16.msra.mxu0 %v1567
        %2003 = vmatprep.mubr.bf16.mxu0 %v289
        %2004 = vmatmul.mubr.bf16.gmra.mrb[0].mxu0 %v288
        %v2005 = vpop.f32.mrb[0].mxu0
        %v2006 = vadd.f32 %v1965, %v2005
        %v2007 = vpop.f32.mrb[0].mxu0
        %v2008 = vadd.f32 %v1967, %v2007
        %v2009 = vpop.f32.mrb[0].mxu0
        %v2010 = vpop.f32.mrb[0].mxu0
        %2011 = vdwg.mxu0
        %2012 = vmatprep.subr.bf16.mxu0 %v1318
        %2013 = vmatpush1.bf16.msra.mxu0 %v1317
        %2014 = vmatprep.subr.bf16.mxu0 %v1322
        %2015 = vmatpush1.bf16.msra.mxu0 %v1321
        %2016 = vmatprep.subr.bf16.mxu0 %v1326
        %2017 = vmatpush1.bf16.msra.mxu0 %v1325
        %2018 = vmatprep.subr.bf16.mxu0 %v1330
        %2019 = vmatpush1.bf16.msra.mxu0 %v1329
        %2020 = vmatprep.subr.bf16.mxu0 %v1334
        %2021 = vmatpush1.bf16.msra.mxu0 %v1333
        %2022 = vmatprep.subr.bf16.mxu0 %v1338
        %2023 = vmatpush1.bf16.msra.mxu0 %v1337
        %2024 = vmatprep.subr.bf16.mxu0 %v1342
        %2025 = vmatpush1.bf16.msra.mxu0 %v1341
        %2026 = vmatprep.subr.bf16.mxu0 %v1346
        %2027 = vmatpush1.bf16.msra.mxu0 %v1345
        %2028 = vmatprep.subr.bf16.mxu0 %v1350
        %2029 = vmatpush1.bf16.msra.mxu0 %v1349
        %2030 = vmatprep.subr.bf16.mxu0 %v1354
        %2031 = vmatpush1.bf16.msra.mxu0 %v1353
        %2032 = vmatprep.subr.bf16.mxu0 %v1358
        %2033 = vmatpush1.bf16.msra.mxu0 %v1357
        %2034 = vmatprep.subr.bf16.mxu0 %v1362
        %2035 = vmatpush1.bf16.msra.mxu0 %v1361
        %2036 = vmatprep.subr.bf16.mxu0 %v1366
        %2037 = vmatpush1.bf16.msra.mxu0 %v1365
        %2038 = vmatprep.subr.bf16.mxu0 %v1370
        %2039 = vmatpush1.bf16.msra.mxu0 %v1369
        %2040 = vmatprep.subr.bf16.mxu0 %v1374
        %2041 = vmatpush1.bf16.msra.mxu0 %v1373
        %2042 = vmatprep.subr.bf16.mxu0 %v1378
        %2043 = vmatpush1.bf16.msra.mxu0 %v1377
        %2044 = vmatprep.mubr.bf16.mxu0 %v283
        %2045 = vmatmul.mubr.bf16.gmra.mrb[0].mxu0 %v282
        %v2046 = vpop.f32.mrb[0].mxu0
        %v2047 = vadd.f32 %v1839, %v2046
        %v2048 = vpop.f32.mrb[0].mxu0
        %v2049 = vadd.f32 %v1843, %v2048
        %v2050 = vpop.f32.mrb[0].mxu0
        %v2051 = vpop.f32.mrb[0].mxu0
        %2052 = vdwg.mxu0
        %2053 = vmatprep.subr.bf16.mxu0 %v1382
        %2054 = vmatpush1.bf16.msra.mxu0 %v1381
        %2055 = vmatprep.subr.bf16.mxu0 %v1386
        %2056 = vmatpush1.bf16.msra.mxu0 %v1385
        %2057 = vmatprep.subr.bf16.mxu0 %v1390
        %2058 = vmatpush1.bf16.msra.mxu0 %v1389
        %2059 = vmatprep.subr.bf16.mxu0 %v1394
        %2060 = vmatpush1.bf16.msra.mxu0 %v1393
        %2061 = vmatprep.subr.bf16.mxu0 %v1398
        %2062 = vmatpush1.bf16.msra.mxu0 %v1397
        %2063 = vmatprep.subr.bf16.mxu0 %v1402
        %2064 = vmatpush1.bf16.msra.mxu0 %v1401
        %2065 = vmatprep.subr.bf16.mxu0 %v1406
        %2066 = vmatpush1.bf16.msra.mxu0 %v1405
        %2067 = vmatprep.subr.bf16.mxu0 %v1410
        %2068 = vmatpush1.bf16.msra.mxu0 %v1409
        %2069 = vmatprep.subr.bf16.mxu0 %v1414
        %2070 = vmatpush1.bf16.msra.mxu0 %v1413
        %2071 = vmatprep.subr.bf16.mxu0 %v1418
        %2072 = vmatpush1.bf16.msra.mxu0 %v1417
        %2073 = vmatprep.subr.bf16.mxu0 %v1422
        %2074 = vmatpush1.bf16.msra.mxu0 %v1421
        %2075 = vmatprep.subr.bf16.mxu0 %v1426
        %2076 = vmatpush1.bf16.msra.mxu0 %v1425
        %2077 = vmatprep.subr.bf16.mxu0 %v1430
        %2078 = vmatpush1.bf16.msra.mxu0 %v1429
        %2079 = vmatprep.subr.bf16.mxu0 %v1434
        %2080 = vmatpush1.bf16.msra.mxu0 %v1433
        %2081 = vmatprep.subr.bf16.mxu0 %v1438
        %2082 = vmatpush1.bf16.msra.mxu0 %v1437
        %2083 = vmatprep.subr.bf16.mxu0 %v1442
        %2084 = vmatpush1.bf16.msra.mxu0 %v1441
        %2085 = vmatprep.mubr.bf16.mxu0 %v285
        %2086 = vmatmul.mubr.bf16.gmra.mrb[0].mxu0 %v284
        %v2087 = vpop.f32.mrb[0].mxu0
        %v2088 = vadd.f32 %v2047, %v2087
        %v2089 = vpop.f32.mrb[0].mxu0
        %v2090 = vadd.f32 %v2049, %v2089
        %v2091 = vpop.f32.mrb[0].mxu0
        %v2092 = vpop.f32.mrb[0].mxu0
        %2093 = vdwg.mxu0
        %2094 = vmatprep.subr.bf16.mxu0 %v1446
        %2095 = vmatpush1.bf16.msra.mxu0 %v1445
        %2096 = vmatprep.subr.bf16.mxu0 %v1450
        %2097 = vmatpush1.bf16.msra.mxu0 %v1449
        %2098 = vmatprep.subr.bf16.mxu0 %v1454
        %2099 = vmatpush1.bf16.msra.mxu0 %v1453
        %2100 = vmatprep.subr.bf16.mxu0 %v1458
        %2101 = vmatpush1.bf16.msra.mxu0 %v1457
        %2102 = vmatprep.subr.bf16.mxu0 %v1462
        %2103 = vmatpush1.bf16.msra.mxu0 %v1461
        %2104 = vmatprep.subr.bf16.mxu0 %v1466
        %2105 = vmatpush1.bf16.msra.mxu0 %v1465
        %2106 = vmatprep.subr.bf16.mxu0 %v1470
        %2107 = vmatpush1.bf16.msra.mxu0 %v1469
        %2108 = vmatprep.subr.bf16.mxu0 %v1474
        %2109 = vmatpush1.bf16.msra.mxu0 %v1473
        %2110 = vmatprep.subr.bf16.mxu0 %v1478
        %2111 = vmatpush1.bf16.msra.mxu0 %v1477
        %2112 = vmatprep.subr.bf16.mxu0 %v1482
        %2113 = vmatpush1.bf16.msra.mxu0 %v1481
        %2114 = vmatprep.subr.bf16.mxu0 %v1486
        %2115 = vmatpush1.bf16.msra.mxu0 %v1485
        %2116 = vmatprep.subr.bf16.mxu0 %v1490
        %2117 = vmatpush1.bf16.msra.mxu0 %v1489
        %2118 = vmatprep.subr.bf16.mxu0 %v1494
        %2119 = vmatpush1.bf16.msra.mxu0 %v1493
        %2120 = vmatprep.subr.bf16.mxu0 %v1498
        %2121 = vmatpush1.bf16.msra.mxu0 %v1497
        %2122 = vmatprep.subr.bf16.mxu0 %v1502
        %2123 = vmatpush1.bf16.msra.mxu0 %v1501
        %2124 = vmatprep.subr.bf16.mxu0 %v1506
        %2125 = vmatpush1.bf16.msra.mxu0 %v1505
        %2126 = vmatprep.mubr.bf16.mxu0 %v287
        %2127 = vmatmul.mubr.bf16.gmra.mrb[0].mxu0 %v286
        %v2128 = vpop.f32.mrb[0].mxu0
        %v2129 = vadd.f32 %v2088, %v2128
        %v2130 = vpop.f32.mrb[0].mxu0
        %v2131 = vadd.f32 %v2090, %v2130
        %v2132 = vpop.f32.mrb[0].mxu0
        %v2133 = vpop.f32.mrb[0].mxu0
        %2134 = vdwg.mxu0
        %2135 = vmatprep.subr.bf16.mxu0 %v1510
        %2136 = vmatpush1.bf16.msra.mxu0 %v1509
        %2137 = vmatprep.subr.bf16.mxu0 %v1514
        %2138 = vmatpush1.bf16.msra.mxu0 %v1513
        %2139 = vmatprep.subr.bf16.mxu0 %v1518
        %2140 = vmatpush1.bf16.msra.mxu0 %v1517
        %2141 = vmatprep.subr.bf16.mxu0 %v1522
        %2142 = vmatpush1.bf16.msra.mxu0 %v1521
        %2143 = vmatprep.subr.bf16.mxu0 %v1526
        %2144 = vmatpush1.bf16.msra.mxu0 %v1525
        %2145 = vmatprep.subr.bf16.mxu0 %v1530
        %2146 = vmatpush1.bf16.msra.mxu0 %v1529
        %2147 = vmatprep.subr.bf16.mxu0 %v1534
        %2148 = vmatpush1.bf16.msra.mxu0 %v1533
        %2149 = vmatprep.subr.bf16.mxu0 %v1538
        %2150 = vmatpush1.bf16.msra.mxu0 %v1537
        %2151 = vmatprep.subr.bf16.mxu0 %v1542
        %2152 = vmatpush1.bf16.msra.mxu0 %v1541
        %2153 = vmatprep.subr.bf16.mxu0 %v1546
        %2154 = vmatpush1.bf16.msra.mxu0 %v1545
        %2155 = vmatprep.subr.bf16.mxu0 %v1550
        %2156 = vmatpush1.bf16.msra.mxu0 %v1549
        %2157 = vmatprep.subr.bf16.mxu0 %v1554
        %2158 = vmatpush1.bf16.msra.mxu0 %v1553
        %2159 = vmatprep.subr.bf16.mxu0 %v1558
        %2160 = vmatpush1.bf16.msra.mxu0 %v1557
        %2161 = vmatprep.subr.bf16.mxu0 %v1562
        %2162 = vmatpush1.bf16.msra.mxu0 %v1561
        %2163 = vmatprep.subr.bf16.mxu0 %v1566
        %2164 = vmatpush1.bf16.msra.mxu0 %v1565
        %2165 = vmatprep.subr.bf16.mxu0 %v1570
        %2166 = vmatpush1.bf16.msra.mxu0 %v1569
        %2167 = vmatprep.mubr.bf16.mxu0 %v289
        %2168 = vmatmul.mubr.bf16.gmra.mrb[0].mxu0 %v288
        %v2169 = vpop.f32.mrb[0].mxu0
        %v2170 = vadd.f32 %v2129, %v2169
        %v2171 = vpop.f32.mrb[0].mxu0
        %v2172 = vadd.f32 %v2131, %v2171
        %v2173 = vpop.f32.mrb[0].mxu0
        %v2174 = vpop.f32.mrb[0].mxu0
        %2175 = vdwg.mxu0
        %v2180 = vcombine.low %v2006, %v2008
        %v2181 = vcombine.low %v2170, %v2172
        %v2183 = vunpack.c.l.s4 1966171168
        %v2184 = vunpack.c.0.s8 %v2183
        %v2185 = vlaneseq
        %v2186 = vshrl.u32 %v2185, 7
        %v2187 = vsub.s32 %v2184, %v2186
        %v2188 = vrot.slane %v2180, %v2187
        %v2190 = vunpack.c.l.s4 1966171168
        %v2191 = vunpack.c.0.s8 %v2190
        %v2192 = vlaneseq
        %v2193 = vshrl.u32 %v2192, 7
        %v2194 = vsub.s32 %v2191, %v2193
        %v2195 = vrot.slane %v2181, %v2194
        %v2196 = vcombine.low %v2188, %v2195
        %v2198 = vunpack.c.l.s4 1966171168
        %v2199 = vunpack.c.0.s8 %v2198
        %v2200 = vlaneseq
        %v2201 = vshrl.u32 %v2200, 7
        %v2202 = vsub.s32 %v2199, %v2201
        %v2203 = vrot.slane %v2196, %v2202
        %v2205 = vlaneseq
        %vm2206 = vcmp.ge.s32.totalorder %v2205, 0
        %vm2207 = vcmp.lt.s32.totalorder %v2205, 512
        %vm2208 = vmand %vm2206, %vm2207
        %2209 = vst.msk [vmem:[%s236] sm:$0xf] %vm2208, %v2203
        %s2210 = sand.u32 %s102, 1
        %s2211 = scalar_lea.sflag [#allocation4], %s2210
        %s2212 = sand.u32 %s102, 1
        %s2213 = smul.addr %s2212, 4
        %s2214 = scalar_lea.vmem [#allocation8], %s2213
        // Predicated region
        $region45: #{linear_pallas.1} parent=31 // pred_check
          %p2215 = pneg %p112
        $region46: #{linear_pallas.1} parent=31 // pred_check_branch
          %2217 = sbr.rel (%p2215) target = $region48
        $region47: #{linear_pallas.1} parent=31 // pred_region
          %s2218 = smul.u32 4, %s21
          %s2220 = ssub.s32 64, 64
          %2221 = vsyncadd %s2211, %s2220
          %s2222 = smul.addr %s2218, 16
          %s2223 = scalar_lea.hbm %s3, %s2222
          %s2225 = sshll.u32 %s2214, 4
          %s2226 = int_to_ptr.vmem [resolvable:$true] %s2225
          %2228 = dma.vmem_to_hbm [thread:$0]  %s2226, 64, %s2223, %s2211
        $region48: #{linear_pallas.1} parent=31 // pred_fallthru
          _
      $region32: #{linear_pallas.1} parent=5 // pred_fallthru
        _
      %p2229 = scmp.le.s32.totalorder 2, %s16
      // Predicated region
      $region49: #{linear_pallas.1} parent=5 // pred_check
        %p2230 = pneg %p2229
      $region50: #{linear_pallas.1} parent=5 // pred_check_branch
        %2232 = sbr.rel (%p2230) target = $region52
      $region51: #{linear_pallas.1} parent=5 // pred_region
        %s2233 = ssub.s32 %s16, 2
        // Predicated region
        $region53: #{linear_pallas.1} parent=51 // pred_check
          %p2234 = pneg %p118
        $region54: #{linear_pallas.1} parent=51 // pred_check_branch
          %2236 = sbr.rel (%p2234) target = $region56
        $region55: #{linear_pallas.1} parent=51 // pred_region
          %s2237 = sand.u32 %s103, 1
          %s2238 = scalar_lea.sflag [#allocation4], %s2237
          %s2239 = sand.u32 %s103, 1
          %s2240 = smul.addr %s2239, 4
          %s2241 = scalar_lea.vmem [#allocation8], %s2240
          %2242 = dma.done %s2238, 64
        $region56: #{linear_pallas.1} parent=51 // pred_fallthru
          _
      $region52: #{linear_pallas.1} parent=5 // pred_fallthru
        _
    $region6: #{linear_pallas.1} parent=1 // loop_footer
      %s20 = sadd.s32 1, %s16
    $region7: #{linear_pallas.1} parent=1 // loop_footer_branch
      %15 = sbr.rel target = $region3
    $region8: #{linear_pallas.1} parent=1 // loop_exit
      _
    %2243 = vsyncpa [#allocation3], 1
    %s2244 = scalar_lea.sflag [#allocation3], 1
    %2245 = vsyncpa %s2244, 1
    %2246 = vsyncpa [#allocation6], 1
    %s2247 = scalar_lea.sflag [#allocation6], 1
    %2248 = vsyncpa %s2247, 1
    %2249 = vsyncpa [#allocation4], 1
    %s2250 = scalar_lea.sflag [#allocation4], 1
    %2251 = vsyncpa %s2250, 1

</llo_original>
